<compile_context>
chip_gen: v7x
topology: tpu7x:2x2x1
jax: 0.10.0
libtpu: 0.0.40
codegen_flags: <defaults>
</compile_context>

<pallas_src>
import math

import jax
import jax.numpy as jnp
from jax import lax
from jax.experimental import pallas as pl
from jax.experimental.pallas import tpu as pltpu

LN_EPS = 1e-6


def simpool_kernel(x_ref, lnw_ref, lnb_ref, w_ref, o_ref):
    # x_ref: (Bt, d, N) block -- features d on sublanes, spatial N on lanes.
    x = x_ref[...].astype(jnp.float32)                       # (Bt, d, N)
    bt, d, n = x.shape

    # gap_cls: mean over spatial (lane-axis reduce).
    gap = jnp.sum(x, axis=2) * (1.0 / n)                     # (Bt, d)

    # LayerNorm stats over features (sublane-axis reduce), single pass.
    sx = jnp.sum(x, axis=1)                                  # (Bt, N)
    sxx = jnp.sum(x * x, axis=1)                             # (Bt, N)
    mu = sx * (1.0 / d)                                      # (Bt, N)
    var = jnp.maximum(sxx * (1.0 / d) - mu * mu, 0.0)        # guard cancellation
    r = lax.rsqrt(var + LN_EPS)                              # (Bt, N)

    # a = gap @ (Wq^T Wk * d^-0.5 * lnw)   -- tiny (Bt,d)x(d,d) MXU matmul.
    a = jnp.dot(gap, w_ref[...], preferred_element_type=jnp.float32)  # (Bt, d)
    c1 = jnp.sum(a, axis=1, keepdims=True)                   # (Bt, 1)

    # logits_n = r_n * (sum_d a_d * x_dn - mu_n * c1); the lnb contribution is
    # constant per row -> softmax-invariant -> dropped.
    s = jnp.sum(a[:, :, None] * x, axis=1)                   # (Bt, N)
    logits = r * (s - mu * c1)                               # (Bt, N)

    # Softmax over N (lane axis); denominator reciprocal on the EUP.
    mmax = jnp.max(logits, axis=-1, keepdims=True)
    e = jnp.exp(logits - mmax)
    denom = jnp.sum(e, axis=-1, keepdims=True)               # (Bt, 1)
    inv = pl.reciprocal(denom, approx=True)
    attn = e * inv                                           # (Bt, N)
    attn_sum = denom * inv                                   # (Bt, 1), ~= 1

    # out_d = lnw_d * (sum_n w_n x_dn - sum_n w_n mu_n) + lnb_d * sum_n attn_n
    wn = attn * r                                            # (Bt, N)
    t = jnp.sum(wn[:, None, :] * x, axis=2)                  # (Bt, d)
    u = jnp.sum(wn * mu, axis=-1, keepdims=True)             # (Bt, 1)
    out = lnw_ref[...] * (t - u) + lnb_ref[...] * attn_sum   # (Bt, d)

    # TODO(synk): gamma/use_beta power-mean pooling branch and the 3-D (B,N,d)
    # input path are not implemented (module defaults: gamma=None, 4-D NCHW).
    o_ref[0] = out.astype(o_ref.dtype)


def _default_vmem_budget_bytes():
    """~75% of physical VMEM, capped at 96 MiB (v5e/v6e: 128 MiB, v7x: 64 MiB)."""
    cap = 128 * 1024 * 1024
    try:
        cap = int(pltpu.get_tpu_info().vmem_capacity_bytes)
    except Exception:
        pass
    return int(min(cap * 3 // 4, 96 * 1024 * 1024))


def _choose_batch_tile(B, N, d, x_itemsize, vmem_budget_bytes):
    """Largest divisor-of-B batch tile whose live VMEM footprint fits the budget.

    Footprint per step = double-buffered x block (native dtype) + ~3 live
    f32-sized (Bt,d,N) temporaries inside the kernel (upcast copy + one
    product/reduce operand at a time + headroom) + double-buffered output
    block, plus the double-buffered constant operands (w_fold, lnw, lnb).
    """
    fixed = 2 * (d * d + 2 * d) * 4
    per_b = 2 * d * N * x_itemsize + 3 * d * N * 4 + 2 * d * 4
    avail = vmem_budget_bytes - fixed
    # TODO(synk): an N-tiled online-softmax path is needed when one batch
    # element does not fit VMEM (it would also keep both v7x TCs busy at B<=2).
    assert avail >= per_b, (
        "single batch element exceeds the VMEM budget; N-tiling required")
    bt_max = int(max(1, min(B, avail // per_b)))
    if B > 1:
        bt_max = min(bt_max, max(1, B // 2))     # keep >=2 grid steps (v7x: 2 TCs)
    for cand in range(bt_max, 0, -1):            # exact divisor -> no pad, no ragged tail
        if B % cand == 0:
            return cand
    return 1


def fold_simpool_weights(ln_w, ln_b, wq, wk):
    """Hoisted weight fold: do this once per weight set, not per forward call."""
    d = int(ln_w.shape[0])
    scale = float(d) ** (-0.5)
    lnw = jnp.asarray(ln_w, jnp.float32)
    lnb = jnp.asarray(ln_b, jnp.float32)
    w_fold = (jnp.asarray(wq, jnp.float32).T @ jnp.asarray(wk, jnp.float32)) * scale
    w_fold = w_fold * lnw[None, :]               # fold LayerNorm scale into columns
    return w_fold, lnw.reshape(1, d), lnb.reshape(1, d)


def simpool_forward(x_nchw, ln_w=None, ln_b=None, wq=None, wk=None, *,
                    folded=None, vmem_budget_bytes=None):
    """x_nchw: (B, d, H, W), any float dtype. Returns (B, d) = SimPool(x).squeeze()."""
    B, d, H, W = x_nchw.shape
    N = H * W
    # NCHW -> (B, d, N): contiguous reshape, native dtype -> x read from HBM once.
    x = x_nchw.reshape(B, d, N)

    if folded is None:
        folded = fold_simpool_weights(ln_w, ln_b, wq, wk)
    w_fold, lnw, lnb = folded

    if vmem_budget_bytes is None:
        vmem_budget_bytes = _default_vmem_budget_bytes()
    bt = _choose_batch_tile(B, N, d, x.dtype.itemsize, vmem_budget_bytes)
    g = B // bt

    out = pl.pallas_call(
        simpool_kernel,
        out_shape=jax.ShapeDtypeStruct((g, bt, d), x.dtype),
        grid=(g,),
        in_specs=[
            pl.BlockSpec((bt, d, N), lambda b: (b, 0, 0)),
            pl.BlockSpec((1, d), lambda b: (0, 0)),
            pl.BlockSpec((1, d), lambda b: (0, 0)),
            pl.BlockSpec((d, d), lambda b: (0, 0)),
        ],
        out_specs=pl.BlockSpec((1, bt, d), lambda b: (b, 0, 0)),
        compiler_params=pltpu.CompilerParams(
            dimension_semantics=("parallel",),
            vmem_limit_bytes=int(vmem_budget_bytes)),
    )(x, lnw, lnb, w_fold)
    return out.reshape(B, d)


def simpool_reference(x_nchw, ln_w, ln_b, wq, wk):
    """Pure-JAX reference mirroring the PyTorch forward (defaults, unfused)."""
    B, d, H, W = x_nchw.shape
    x = jnp.transpose(x_nchw.reshape(B, d, H * W), (0, 2, 1)).astype(jnp.float32)
    gap = jnp.mean(x, axis=1, keepdims=True)                        # (B, 1, d)
    mu = jnp.mean(x, axis=-1, keepdims=True)
    var = jnp.mean((x - mu) ** 2, axis=-1, keepdims=True)
    k = (x - mu) / jnp.sqrt(var + LN_EPS) * ln_w + ln_b             # (B, N, d)
    q = gap @ wq.T                                                  # (B, 1, d)
    kk = k @ wk.T                                                   # (B, N, d)
    scale = d ** (-0.5)
    logits = jnp.einsum("bqd,bnd->bqn", q, kk) * scale
    attn = jax.nn.softmax(logits, axis=-1)
    out = jnp.einsum("bqn,bnd->bqd", attn, k)
    return out.reshape(B, d)


if __name__ == "__main__":
    key = jax.random.PRNGKey(0)
    B, d, H, W = 16, 32, 16, 16

    k_x, k_q, k_k, k_w, k_b = jax.random.split(key, 5)
    x = jax.random.normal(k_x, (B, d, H, W), dtype=jnp.float32)

    # Deterministic parameter init (shapes from nn.LayerNorm(d), nn.Linear(d, d)).
    bound = 1.0 / math.sqrt(d)
    wq = jax.random.uniform(k_q, (d, d), jnp.float32, -bound, bound)
    wk = jax.random.uniform(k_k, (d, d), jnp.float32, -bound, bound)
    # Non-trivial LN affine so the algebraic folding is actually exercised.
    ln_w = 1.0 + 0.1 * jax.random.normal(k_w, (d,), jnp.float32)
    ln_b = 0.05 * jax.random.normal(k_b, (d,), jnp.float32)

    folded = fold_simpool_weights(ln_w, ln_b, wq, wk)   # hoisted: once per weight set
    out = simpool_forward(x, folded=folded)
    out = jax.block_until_ready(out)

    ref = simpool_reference(x, ln_w, ln_b, wq, wk)
    assert out.shape == (B, d)
    assert jnp.allclose(out, ref, atol=2e-3, rtol=2e-3), "mismatch vs reference"

    print("KERNEL_OK")
</pallas_src>

<mosaic_0001>
module attributes {stable_mosaic.version = 11 : i64} {
  func.func @simpool_kernel(%arg0: i32, %arg1: memref<8x32x256xf32, #tpu.memory_space<vmem>>, %arg2: memref<1x32xf32, #tpu.memory_space<vmem>>, %arg3: memref<1x32xf32, #tpu.memory_space<vmem>>, %arg4: memref<32x32xf32, #tpu.memory_space<vmem>>, %arg5: memref<1x8x32xf32, #tpu.memory_space<vmem>>) attributes {dimension_semantics = [#tpu.dimension_semantics<parallel>], iteration_bounds = array<i64: 2>, scalar_prefetch = 0 : i64, scratch_operands = 0 : i64, tpu.core_type = #tpu.core_type<tc>, window_params = [{transform_indices = @transform_0, window_bounds = array<i64: 8, 32, 256>}, {pipeline_mode = #tpu.pipeline_mode<synchronous>, transform_indices = @transform_1, window_bounds = array<i64: 1, 32>}, {pipeline_mode = #tpu.pipeline_mode<synchronous>, transform_indices = @transform_2, window_bounds = array<i64: 1, 32>}, {pipeline_mode = #tpu.pipeline_mode<synchronous>, transform_indices = @transform_3, window_bounds = array<i64: 32, 32>}, {transform_indices = @transform_4, window_bounds = array<i64: 1, 8, 32>}]} {
    %c0 = arith.constant 0 : index
    %c0_0 = arith.constant 0 : index
    %c0_1 = arith.constant 0 : index
    %0 = vector.load %arg1[%c0, %c0_0, %c0_1] : memref<8x32x256xf32, #tpu.memory_space<vmem>>, vector<8x32x256xf32>
    %cst = arith.constant dense<0.000000e+00> : vector<8x32xf32>
    %1 = vector.multi_reduction <add>, %0, %cst [2] : vector<8x32x256xf32> to vector<8x32xf32>
    %cst_2 = arith.constant 3.906250e-03 : f32
    %2 = vector.broadcast %cst_2 : f32 to vector<8x32xf32>
    %3 = arith.mulf %1, %2 : vector<8x32xf32>
    %cst_3 = arith.constant dense<0.000000e+00> : vector<8x256xf32>
    %4 = vector.multi_reduction <add>, %0, %cst_3 [1] : vector<8x32x256xf32> to vector<8x256xf32>
    %5 = arith.mulf %0, %0 : vector<8x32x256xf32>
    %cst_4 = arith.constant dense<0.000000e+00> : vector<8x256xf32>
    %6 = vector.multi_reduction <add>, %5, %cst_4 [1] : vector<8x32x256xf32> to vector<8x256xf32>
    %cst_5 = arith.constant 3.125000e-02 : f32
    %7 = vector.broadcast %cst_5 : f32 to vector<8x256xf32>
    %8 = arith.mulf %4, %7 : vector<8x256xf32>
    %cst_6 = arith.constant 3.125000e-02 : f32
    %9 = vector.broadcast %cst_6 : f32 to vector<8x256xf32>
    %10 = arith.mulf %6, %9 : vector<8x256xf32>
    %11 = arith.mulf %8, %8 : vector<8x256xf32>
    %12 = arith.subf %10, %11 : vector<8x256xf32>
    %cst_7 = arith.constant 0.000000e+00 : f32
    %13 = vector.broadcast %cst_7 : f32 to vector<8x256xf32>
    %14 = arith.maximumf %12, %13 : vector<8x256xf32>
    %cst_8 = arith.constant 9.99999997E-7 : f32
    %15 = vector.broadcast %cst_8 : f32 to vector<8x256xf32>
    %16 = arith.addf %14, %15 : vector<8x256xf32>
    %17 = math.rsqrt %16 : vector<8x256xf32>
    %c0_9 = arith.constant 0 : index
    %c0_10 = arith.constant 0 : index
    %18 = vector.load %arg4[%c0_9, %c0_10] : memref<32x32xf32, #tpu.memory_space<vmem>>, vector<32x32xf32>
    %cst_11 = arith.constant dense<0.000000e+00> : vector<8x32xf32>
    %19 = tpu.matmul %3, %18, %cst_11 {dimension_numbers = #tpu.dot_dimension_numbers<[1], [0], [0], [1], [0, 0, 1, 1], [], []>} : vector<8x32xf32>, vector<32x32xf32>, vector<8x32xf32> -> vector<8x32xf32>
    %cst_12 = arith.constant dense<0.000000e+00> : vector<8xf32>
    %20 = vector.multi_reduction <add>, %19, %cst_12 [1] : vector<8x32xf32> to vector<8xf32>
    %21 = vector.shape_cast %20 : vector<8xf32> to vector<8x1xf32>
    %22 = vector.shape_cast %19 : vector<8x32xf32> to vector<8x32x1xf32>
    %23 = vector.broadcast %22 : vector<8x32x1xf32> to vector<8x32x256xf32>
    %24 = arith.mulf %23, %0 : vector<8x32x256xf32>
    %cst_13 = arith.constant dense<0.000000e+00> : vector<8x256xf32>
    %25 = vector.multi_reduction <add>, %24, %cst_13 [1] : vector<8x32x256xf32> to vector<8x256xf32>
    %26 = vector.broadcast %21 : vector<8x1xf32> to vector<8x256xf32>
    %27 = arith.mulf %8, %26 : vector<8x256xf32>
    %28 = arith.subf %25, %27 : vector<8x256xf32>
    %29 = arith.mulf %17, %28 : vector<8x256xf32>
    %cst_14 = arith.constant dense<0xFF800000> : vector<8xf32>
    %30 = vector.multi_reduction <maximumf>, %29, %cst_14 [1] : vector<8x256xf32> to vector<8xf32>
    %31 = vector.shape_cast %30 : vector<8xf32> to vector<8x1xf32>
    %32 = vector.broadcast %31 : vector<8x1xf32> to vector<8x256xf32>
    %33 = arith.subf %29, %32 : vector<8x256xf32>
    %34 = math.exp %33 : vector<8x256xf32>
    %cst_15 = arith.constant dense<0.000000e+00> : vector<8xf32>
    %35 = vector.multi_reduction <add>, %34, %cst_15 [1] : vector<8x256xf32> to vector<8xf32>
    %36 = vector.shape_cast %35 : vector<8xf32> to vector<8x1xf32>
    %37 = tpu.reciprocal %36 {approx = true} : vector<8x1xf32> -> vector<8x1xf32>
    %38 = vector.broadcast %37 : vector<8x1xf32> to vector<8x256xf32>
    %39 = arith.mulf %34, %38 : vector<8x256xf32>
    %40 = arith.mulf %36, %37 : vector<8x1xf32>
    %41 = arith.mulf %39, %17 : vector<8x256xf32>
    %42 = vector.shape_cast %41 : vector<8x256xf32> to vector<8x1x256xf32>
    %43 = vector.broadcast %42 : vector<8x1x256xf32> to vector<8x32x256xf32>
    %44 = arith.mulf %43, %0 : vector<8x32x256xf32>
    %cst_16 = arith.constant dense<0.000000e+00> : vector<8x32xf32>
    %45 = vector.multi_reduction <add>, %44, %cst_16 [2] : vector<8x32x256xf32> to vector<8x32xf32>
    %46 = arith.mulf %41, %8 : vector<8x256xf32>
    %cst_17 = arith.constant dense<0.000000e+00> : vector<8xf32>
    %47 = vector.multi_reduction <add>, %46, %cst_17 [1] : vector<8x256xf32> to vector<8xf32>
    %48 = vector.shape_cast %47 : vector<8xf32> to vector<8x1xf32>
    %c0_18 = arith.constant 0 : index
    %c0_19 = arith.constant 0 : index
    %49 = vector.load %arg2[%c0_18, %c0_19] : memref<1x32xf32, #tpu.memory_space<vmem>>, vector<1x32xf32>
    %50 = vector.broadcast %48 : vector<8x1xf32> to vector<8x32xf32>
    %51 = arith.subf %45, %50 : vector<8x32xf32>
    %52 = vector.broadcast %49 : vector<1x32xf32> to vector<8x32xf32>
    %53 = arith.mulf %52, %51 : vector<8x32xf32>
    %c0_20 = arith.constant 0 : index
    %c0_21 = arith.constant 0 : index
    %54 = vector.load %arg3[%c0_20, %c0_21] : memref<1x32xf32, #tpu.memory_space<vmem>>, vector<1x32xf32>
    %55 = vector.broadcast %54 : vector<1x32xf32> to vector<8x32xf32>
    %56 = vector.broadcast %40 : vector<8x1xf32> to vector<8x32xf32>
    %57 = arith.mulf %55, %56 : vector<8x32xf32>
    %58 = arith.addf %53, %57 : vector<8x32xf32>
    %c0_22 = arith.constant 0 : index
    %c0_23 = arith.constant 0 : index
    %c0_24 = arith.constant 0 : index
    %59 = vector.load %arg5[%c0_22, %c0_23, %c0_24] : memref<1x8x32xf32, #tpu.memory_space<vmem>>, vector<1x8x32xf32>
    %60 = vector.shape_cast %59 : vector<1x8x32xf32> to vector<8x32xf32>
    %61 = vector.shape_cast %58 : vector<8x32xf32> to vector<1x8x32xf32>
    tpu.vector_store %arg5[%c0_22, %c0_23, %c0_24], %61 {strides = array<i32>} : memref<1x8x32xf32, #tpu.memory_space<vmem>>, vector<1x8x32xf32>,
    return
  }
  func.func @transform_0(%arg0: i32) -> (i32, i32, i32) {
    %c0_i32 = arith.constant 0 : i32
    %c0_i32_0 = arith.constant 0 : i32
    %c0_i32_1 = arith.constant 0 : i32
    return %arg0, %c0_i32, %c0_i32_0 : i32, i32, i32
  }
  func.func @transform_1(%arg0: i32) -> (i32, i32) {
    %c0_i32 = arith.constant 0 : i32
    %c0_i32_0 = arith.constant 0 : i32
    %c0_i32_1 = arith.constant 0 : i32
    return %c0_i32, %c0_i32_0 : i32, i32
  }
  func.func @transform_2(%arg0: i32) -> (i32, i32) {
    %c0_i32 = arith.constant 0 : i32
    %c0_i32_0 = arith.constant 0 : i32
    %c0_i32_1 = arith.constant 0 : i32
    return %c0_i32, %c0_i32_0 : i32, i32
  }
  func.func @transform_3(%arg0: i32) -> (i32, i32) {
    %c0_i32 = arith.constant 0 : i32
    %c0_i32_0 = arith.constant 0 : i32
    %c0_i32_1 = arith.constant 0 : i32
    return %c0_i32, %c0_i32_0 : i32, i32
  }
  func.func @transform_4(%arg0: i32) -> (i32, i32, i32) {
    %c0_i32 = arith.constant 0 : i32
    %c0_i32_0 = arith.constant 0 : i32
    %c0_i32_1 = arith.constant 0 : i32
    return %arg0, %c0_i32, %c0_i32_0 : i32, i32, i32
  }
}

</mosaic_0001>

<llo_original>
// kernel: tpu_custom_call.1
$region0: #{tpu_custom_call.1}
  #allocation0 [shape = 'u32[]', space=smem, size = 0x4, offset = 0x4, fixed_abs, tag = 'smem constant byte address 0x4 - core index']
  #allocation1 [shape = 'u32[144,128]{1,0:T(1,128)}', space=vmem, size = 0x12000, scoped, tag = 'internal scratch']
  %s0 = inlined_call_operand.hbm [shape: f32[16,32,256], index: 0, kind: input, shape index: {}]
  %s1 = inlined_call_operand.hbm [shape: f32[1,32], index: 1, kind: input, shape index: {}]
  %s2 = inlined_call_operand.hbm [shape: f32[1,32], index: 2, kind: input, shape index: {}]
  %s3 = inlined_call_operand.hbm [shape: f32[32,32], index: 3, kind: input, shape index: {}]
  %s4 = inlined_call_operand.hbm [shape: f32[2,8,32], index: 4, kind: output, shape index: {}]
  %s5 = sld [smem:[#allocation0]]
  $region65: #{tpu_custom_call.1} parent=0
    _
  %s7 = ssub.s32 1, %s5
  %s8 = scalar_select 0, %s7, %s5
  $region1: #{tpu_custom_call.1} parent=0
    #allocation2 [shape = 'u8[524288]{0}', space=vmem, size = 0x80000, scoped, tag = 'input window, operand 0']
    #allocation3 [shape = 's32[2]{0}', space=sflag, size = 0x8, scoped, tag = 'scoped memory for tpu_custom_call.1']
    #allocation4 [shape = 's32[2]{0}', space=sflag, size = 0x8, scoped, tag = 'scoped memory for tpu_custom_call.1']
    #allocation5 [shape = 'u8[512]{0}', space=vmem, size = 0x400, scoped, tag = 'input window, operand 1, single buffered']
    #allocation6 [shape = 's32[1]{0}', space=sflag, size = 0x4, scoped, tag = 'scoped memory for tpu_custom_call.1']
    #allocation7 [shape = 'u8[512]{0}', space=vmem, size = 0x400, scoped, tag = 'input window, operand 2, single buffered']
    #allocation8 [shape = 'u8[16384]{0}', space=vmem, size = 0x4000, scoped, tag = 'input window, operand 3, single buffered']
    #allocation9 [shape = 's32[1]{0}', space=sflag, size = 0x4, scoped, tag = 'scoped memory for tpu_custom_call.1']
    #allocation10 [shape = 'u8[8192]{0}', space=vmem, size = 0x2000, scoped, tag = 'output window, operand 0']
    %9 = vsyncpa [#allocation3], 0
    %s10 = scalar_lea.sflag [#allocation3], 1
    %11 = vsyncpa %s10, 0
    %12 = vsyncpa [#allocation6], 0
    %13 = vsyncpa [#allocation9], 0
    %14 = vsyncpa [#allocation4], 0
    %s15 = scalar_lea.sflag [#allocation4], 1
    %16 = vsyncpa %s15, 0
    loop: start=0, step=1, limit=4
    $region2: #{tpu_custom_call.1} parent=1 // loop_pre_header
      _
    $region3: #{tpu_custom_call.1} parent=1 // loop_header
      %s18 = sphi 0, %s22
      %p19 = scmp.ge.s32.totalorder %s18, 4
      %s28 = sphi 0, %s30
      %s31 = sphi 0, %s28
      %s32 = sphi 0, %s31
      %s48 = sphi 0, %s32
      %s52 = sphi 0, %s52
      %s54 = sphi 0, %s52
      %s55 = sphi 0, %s54
      %s69 = sphi 0, %s55
      %s73 = sphi 0, %s73
      %s75 = sphi 0, %s73
      %s76 = sphi 0, %s75
      %s90 = sphi 0, %s76
      %s94 = sphi 0, %s94
      %s96 = sphi 0, %s94
      %s97 = sphi 0, %s96
      %s111 = sphi 0, %s97
      %s117 = sphi 0, %s119
      %s120 = sphi 0, %s117
      %s121 = sphi 0, %s120
      %s137 = sphi 0, %s121
    $region4: #{tpu_custom_call.1} parent=1 // loop_header_branch
      %21 = sbr.rel (%p19) target = $region8
    $region5: #{tpu_custom_call.1} parent=1 // loop_body
      %s23 = ssub.s32 %s18, 1
      %s24 = ssub.s32 %s18, 2
      %s25 = sadd.s32 %s18, 1
      %s26 = ssub.s32 %s18, %s25
      %p27 = scmp.eq.s32.totalorder %s26, 0
      %s29 = sadd.s32 %s28, 1
      %s30 = scalar_select %p27, %s28, %s29
      %p33 = pneg %p27
      %p34 = scmp.eq.s32.totalorder %s18, 1
      %p35 = por %p33, %p34
      %p36 = scmp.ne.s32.totalorder %s28, %s31
      %p37 = scmp.eq.s32.totalorder %s18, 0
      %p38 = por %p36, %p37
      %p39 = scmp.ne.s32.totalorder %s28, %s31
      %p40 = scmp.eq.s32.totalorder %s23, 1
      %p41 = por %p39, %p40
      %p42 = scmp.ne.s32.totalorder %s31, %s32
      %p43 = scmp.eq.s32.totalorder %s23, 0
      %p44 = por %p42, %p43
      %p45 = scmp.ne.s32.totalorder %s31, %s32
      %p46 = scmp.eq.s32.totalorder %s24, 1
      %p47 = por %p45, %p46
      %p49 = scmp.ne.s32.totalorder %s32, %s48
      %p50 = scmp.eq.s32.totalorder %s24, 0
      %p51 = por %p49, %p50
      %s53 = sadd.s32 %s52, 1
      %p56 = scmp.eq.s32.totalorder %s18, 1
      %p57 = scmp.ne.s32.totalorder %s52, %s54
      %p58 = scmp.eq.s32.totalorder %s18, 0
      %p59 = por %p57, %p58
      %p60 = scmp.ne.s32.totalorder %s52, %s54
      %p61 = scmp.eq.s32.totalorder %s23, 1
      %p62 = por %p60, %p61
      %p63 = scmp.ne.s32.totalorder %s54, %s55
      %p64 = scmp.eq.s32.totalorder %s23, 0
      %p65 = por %p63, %p64
      %p66 = scmp.ne.s32.totalorder %s54, %s55
      %p67 = scmp.eq.s32.totalorder %s24, 1
      %p68 = por %p66, %p67
      %p70 = scmp.ne.s32.totalorder %s55, %s69
      %p71 = scmp.eq.s32.totalorder %s24, 0
      %p72 = por %p70, %p71
      %s74 = sadd.s32 %s73, 1
      %p77 = scmp.eq.s32.totalorder %s18, 1
      %p78 = scmp.ne.s32.totalorder %s73, %s75
      %p79 = scmp.eq.s32.totalorder %s18, 0
      %p80 = por %p78, %p79
      %p81 = scmp.ne.s32.totalorder %s73, %s75
      %p82 = scmp.eq.s32.totalorder %s23, 1
      %p83 = por %p81, %p82
      %p84 = scmp.ne.s32.totalorder %s75, %s76
      %p85 = scmp.eq.s32.totalorder %s23, 0
      %p86 = por %p84, %p85
      %p87 = scmp.ne.s32.totalorder %s75, %s76
      %p88 = scmp.eq.s32.totalorder %s24, 1
      %p89 = por %p87, %p88
      %p91 = scmp.ne.s32.totalorder %s76, %s90
      %p92 = scmp.eq.s32.totalorder %s24, 0
      %p93 = por %p91, %p92
      %s95 = sadd.s32 %s94, 1
      %p98 = scmp.eq.s32.totalorder %s18, 1
      %p99 = scmp.ne.s32.totalorder %s94, %s96
      %p100 = scmp.eq.s32.totalorder %s18, 0
      %p101 = por %p99, %p100
      %p102 = scmp.ne.s32.totalorder %s94, %s96
      %p103 = scmp.eq.s32.totalorder %s23, 1
      %p104 = por %p102, %p103
      %p105 = scmp.ne.s32.totalorder %s96, %s97
      %p106 = scmp.eq.s32.totalorder %s23, 0
      %p107 = por %p105, %p106
      %p108 = scmp.ne.s32.totalorder %s96, %s97
      %p109 = scmp.eq.s32.totalorder %s24, 1
      %p110 = por %p108, %p109
      %p112 = scmp.ne.s32.totalorder %s97, %s111
      %p113 = scmp.eq.s32.totalorder %s24, 0
      %p114 = por %p112, %p113
      %s115 = ssub.s32 %s18, %s25
      %p116 = scmp.eq.s32.totalorder %s115, 0
      %s118 = sadd.s32 %s117, 1
      %s119 = scalar_select %p116, %s117, %s118
      %p122 = pneg %p116
      %p123 = scmp.eq.s32.totalorder %s18, 1
      %p124 = por %p122, %p123
      %p125 = scmp.ne.s32.totalorder %s117, %s120
      %p126 = scmp.eq.s32.totalorder %s18, 0
      %p127 = por %p125, %p126
      %p128 = scmp.ne.s32.totalorder %s117, %s120
      %p129 = scmp.eq.s32.totalorder %s23, 1
      %p130 = por %p128, %p129
      %p131 = scmp.ne.s32.totalorder %s120, %s121
      %p132 = scmp.eq.s32.totalorder %s23, 0
      %p133 = por %p131, %p132
      %p134 = scmp.ne.s32.totalorder %s120, %s121
      %p135 = scmp.eq.s32.totalorder %s24, 1
      %p136 = por %p134, %p135
      %p138 = scmp.ne.s32.totalorder %s121, %s137
      %p139 = scmp.eq.s32.totalorder %s24, 0
      %p140 = por %p138, %p139
      %p141 = scmp.le.s32.totalorder 1, %s18
      %p142 = scmp.lt.s32.totalorder %s18, 3
      %p143 = pnand %p141, %p142
      %p144 = pneg %p143
      // Predicated region
      $region9: #{tpu_custom_call.1} parent=5 // pred_check
        _
      $region10: #{tpu_custom_call.1} parent=5 // pred_check_branch
        %146 = sbr.rel (%p143) target = $region12
      $region11: #{tpu_custom_call.1} parent=5 // pred_region
        %s147 = ssub.s32 %s18, 1
        // Predicated region
        $region13: #{tpu_custom_call.1} parent=11 // pred_check
          %p148 = pneg %p65
        $region14: #{tpu_custom_call.1} parent=11 // pred_check_branch
          %150 = sbr.rel (%p148) target = $region16
        $region15: #{tpu_custom_call.1} parent=11 // pred_region
          %s152 = ssub.s32 16, 16
          %153 = vsyncadd [#allocation6], %s152
          %s155 = sshll.u32 [#allocation5], 4
          %s156 = int_to_ptr.vmem [resolvable:$true] %s155
          %158 = dma.hbm_to_vmem [thread:$0]  %s1, 16, %s156, [#allocation6]
        $region16: #{tpu_custom_call.1} parent=11 // pred_fallthru
          _
        // Predicated region
        $region17: #{tpu_custom_call.1} parent=11 // pred_check
          %p159 = pneg %p86
        $region18: #{tpu_custom_call.1} parent=11 // pred_check_branch
          %161 = sbr.rel (%p159) target = $region20
        $region19: #{tpu_custom_call.1} parent=11 // pred_region
          %s163 = ssub.s32 16, 16
          %164 = vsyncadd [#allocation6], %s163
          %s166 = sshll.u32 [#allocation7], 4
          %s167 = int_to_ptr.vmem [resolvable:$true] %s166
          %169 = dma.hbm_to_vmem [thread:$0]  %s2, 16, %s167, [#allocation6]
        $region20: #{tpu_custom_call.1} parent=11 // pred_fallthru
          _
        // Predicated region
        $region21: #{tpu_custom_call.1} parent=11 // pred_check
          %p170 = pneg %p107
        $region22: #{tpu_custom_call.1} parent=11 // pred_check_branch
          %172 = sbr.rel (%p170) target = $region24
        $region23: #{tpu_custom_call.1} parent=11 // pred_region
          %s174 = ssub.s32 512, 512
          %175 = vsyncadd [#allocation9], %s174
          %s176 = sshll.u32 [#allocation8], 4
          %s177 = int_to_ptr.vmem [resolvable:$true] %s176
          %182 = dma.hbm_to_vmem [thread:$0]  %s3, 512, %s177, [#allocation9], 128, 128, 8
        $region24: #{tpu_custom_call.1} parent=11 // pred_fallthru
          _
      $region12: #{tpu_custom_call.1} parent=5 // pred_fallthru
        _
      %p183 = scmp.lt.s32.totalorder %s18, 2
      // Predicated region
      $region25: #{tpu_custom_call.1} parent=5 // pred_check
        %p184 = pneg %p183
      $region26: #{tpu_custom_call.1} parent=5 // pred_check_branch
        %186 = sbr.rel (%p184) target = $region28
      $region27: #{tpu_custom_call.1} parent=5 // pred_region
        // Predicated region
        $region29: #{tpu_custom_call.1} parent=27 // pred_check
          %p187 = pneg %p38
        $region30: #{tpu_custom_call.1} parent=27 // pred_check_branch
          %189 = sbr.rel (%p187) target = $region32
        $region31: #{tpu_custom_call.1} parent=27 // pred_region
          %s190 = sand.u32 %s28, 1
          %s191 = scalar_lea.sflag [#allocation3], %s190
          %s192 = sand.u32 %s28, 1
          %s193 = smul.addr %s192, 512
          %s194 = scalar_lea.vmem [#allocation2], %s193
          %s195 = smul.u32 8, %s18
          %s197 = ssub.s32 8192, 8192
          %198 = vsyncadd %s191, %s197
          %s199 = smul.addr %s195, 8
          %s200 = smul.addr %s199, 128
          %s201 = scalar_lea.hbm %s0, %s200
          %s202 = sshll.u32 %s194, 4
          %s203 = int_to_ptr.vmem [resolvable:$true] %s202
          %208 = dma.hbm_to_vmem [thread:$0]  %s201, 8192, %s203, %s191, 256, 256, 16
        $region32: #{tpu_custom_call.1} parent=27 // pred_fallthru
          _
      $region28: #{tpu_custom_call.1} parent=5 // pred_fallthru
        _
      %p209 = scmp.le.s32.totalorder 1, %s18
      %p210 = scmp.lt.s32.totalorder %s18, 3
      %p211 = pnand %p209, %p210
      %p212 = pneg %p211
      // Predicated region
      $region33: #{tpu_custom_call.1} parent=5 // pred_check
        _
      $region34: #{tpu_custom_call.1} parent=5 // pred_check_branch
        %214 = sbr.rel (%p211) target = $region36
      $region35: #{tpu_custom_call.1} parent=5 // pred_region
        %s215 = ssub.s32 %s18, 1
        %s216 = sand.u32 %s31, 1
        %s217 = scalar_lea.sflag [#allocation3], %s216
        %s218 = sand.u32 %s31, 1
        %s219 = smul.addr %s218, 512
        %s220 = scalar_lea.vmem [#allocation2], %s219
        // Predicated region
        $region37: #{tpu_custom_call.1} parent=35 // pred_check
          %p221 = pneg %p44
        $region38: #{tpu_custom_call.1} parent=35 // pred_check_branch
          %223 = sbr.rel (%p221) target = $region40
        $region39: #{tpu_custom_call.1} parent=35 // pred_region
          %224 = dma.done %s217, 8192
        $region40: #{tpu_custom_call.1} parent=35 // pred_fallthru
          _
        // Predicated region
        $region41: #{tpu_custom_call.1} parent=35 // pred_check
          %p225 = pneg %p65
        $region42: #{tpu_custom_call.1} parent=35 // pred_check_branch
          %227 = sbr.rel (%p225) target = $region44
        $region43: #{tpu_custom_call.1} parent=35 // pred_region
          %228 = dma.done [#allocation6], 16
        $region44: #{tpu_custom_call.1} parent=35 // pred_fallthru
          _
        // Predicated region
        $region45: #{tpu_custom_call.1} parent=35 // pred_check
          %p229 = pneg %p86
        $region46: #{tpu_custom_call.1} parent=35 // pred_check_branch
          %231 = sbr.rel (%p229) target = $region48
        $region47: #{tpu_custom_call.1} parent=35 // pred_region
          %232 = dma.done [#allocation6], 16
        $region48: #{tpu_custom_call.1} parent=35 // pred_fallthru
          _
        // Predicated region
        $region49: #{tpu_custom_call.1} parent=35 // pred_check
          %p233 = pneg %p107
        $region50: #{tpu_custom_call.1} parent=35 // pred_check_branch
          %235 = sbr.rel (%p233) target = $region52
        $region51: #{tpu_custom_call.1} parent=35 // pred_region
          %236 = dma.done [#allocation9], 512
        $region52: #{tpu_custom_call.1} parent=35 // pred_fallthru
          _
        %s237 = sand.u32 %s31, 1
        %s238 = scalar_lea.sflag [#allocation3], %s237
        %s239 = sand.u32 %s31, 1
        %s240 = smul.addr %s239, 512
        %s241 = scalar_lea.vmem [#allocation2], %s240
        %p242 = pneg %p44
        %p243 = pneg %p41
        %p244 = pneg %p65
        %p245 = pneg %p62
        %p246 = pneg %p86
        %p247 = pneg %p83
        %p248 = pneg %p107
        %p249 = pneg %p104
        %p250 = pneg %p133
        %p251 = pneg %p130
        %s252 = sand.u32 %s120, 1
        %s253 = scalar_lea.sflag [#allocation4], %s252
        %s254 = sand.u32 %s120, 1
        %s255 = smul.addr %s254, 8
        %s256 = scalar_lea.vmem [#allocation10], %s255
        %s257 = smul.u32 8, %s23
        %v258 = vld [vmem:[%s220] sm:$0xff]
        %v259 = vld [vmem:[%s220 + $0x8] sm:$0xff]
        %v260 = vld [vmem:[%s220 + $0x10] sm:$0xff]
        %v261 = vld [vmem:[%s220 + $0x18] sm:$0xff]
        %v262 = vld [vmem:[%s220 + $0x20] sm:$0xff]
        %v263 = vld [vmem:[%s220 + $0x28] sm:$0xff]
        %v264 = vld [vmem:[%s220 + $0x30] sm:$0xff]
        %v265 = vld [vmem:[%s220 + $0x38] sm:$0xff]
        %v266 = vld [vmem:[%s220 + $0x40] sm:$0xff]
        %v267 = vld [vmem:[%s220 + $0x48] sm:$0xff]
        %v268 = vld [vmem:[%s220 + $0x50] sm:$0xff]
        %v269 = vld [vmem:[%s220 + $0x58] sm:$0xff]
        %v270 = vld [vmem:[%s220 + $0x60] sm:$0xff]
        %v271 = vld [vmem:[%s220 + $0x68] sm:$0xff]
        %v272 = vld [vmem:[%s220 + $0x70] sm:$0xff]
        %v273 = vld [vmem:[%s220 + $0x78] sm:$0xff]
        %v274 = vld [vmem:[%s220 + $0x80] sm:$0xff]
        %v275 = vld [vmem:[%s220 + $0x88] sm:$0xff]
        %v276 = vld [vmem:[%s220 + $0x90] sm:$0xff]
        %v277 = vld [vmem:[%s220 + $0x98] sm:$0xff]
        %v278 = vld [vmem:[%s220 + $0xa0] sm:$0xff]
        %v279 = vld [vmem:[%s220 + $0xa8] sm:$0xff]
        %v280 = vld [vmem:[%s220 + $0xb0] sm:$0xff]
        %v281 = vld [vmem:[%s220 + $0xb8] sm:$0xff]
        %v282 = vld [vmem:[%s220 + $0xc0] sm:$0xff]
        %v283 = vld [vmem:[%s220 + $0xc8] sm:$0xff]
        %v284 = vld [vmem:[%s220 + $0xd0] sm:$0xff]
        %v285 = vld [vmem:[%s220 + $0xd8] sm:$0xff]
        %v286 = vld [vmem:[%s220 + $0xe0] sm:$0xff]
        %v287 = vld [vmem:[%s220 + $0xe8] sm:$0xff]
        %v288 = vld [vmem:[%s220 + $0xf0] sm:$0xff]
        %v289 = vld [vmem:[%s220 + $0xf8] sm:$0xff]
        %v290 = vld [vmem:[%s220 + $0x100] sm:$0xff]
        %v291 = vld [vmem:[%s220 + $0x108] sm:$0xff]
        %v292 = vld [vmem:[%s220 + $0x110] sm:$0xff]
        %v293 = vld [vmem:[%s220 + $0x118] sm:$0xff]
        %v294 = vld [vmem:[%s220 + $0x120] sm:$0xff]
        %v295 = vld [vmem:[%s220 + $0x128] sm:$0xff]
        %v296 = vld [vmem:[%s220 + $0x130] sm:$0xff]
        %v297 = vld [vmem:[%s220 + $0x138] sm:$0xff]
        %v298 = vld [vmem:[%s220 + $0x140] sm:$0xff]
        %v299 = vld [vmem:[%s220 + $0x148] sm:$0xff]
        %v300 = vld [vmem:[%s220 + $0x150] sm:$0xff]
        %v301 = vld [vmem:[%s220 + $0x158] sm:$0xff]
        %v302 = vld [vmem:[%s220 + $0x160] sm:$0xff]
        %v303 = vld [vmem:[%s220 + $0x168] sm:$0xff]
        %v304 = vld [vmem:[%s220 + $0x170] sm:$0xff]
        %v305 = vld [vmem:[%s220 + $0x178] sm:$0xff]
        %v306 = vld [vmem:[%s220 + $0x180] sm:$0xff]
        %v307 = vld [vmem:[%s220 + $0x188] sm:$0xff]
        %v308 = vld [vmem:[%s220 + $0x190] sm:$0xff]
        %v309 = vld [vmem:[%s220 + $0x198] sm:$0xff]
        %v310 = vld [vmem:[%s220 + $0x1a0] sm:$0xff]
        %v311 = vld [vmem:[%s220 + $0x1a8] sm:$0xff]
        %v312 = vld [vmem:[%s220 + $0x1b0] sm:$0xff]
        %v313 = vld [vmem:[%s220 + $0x1b8] sm:$0xff]
        %v314 = vld [vmem:[%s220 + $0x1c0] sm:$0xff]
        %v315 = vld [vmem:[%s220 + $0x1c8] sm:$0xff]
        %v316 = vld [vmem:[%s220 + $0x1d0] sm:$0xff]
        %v317 = vld [vmem:[%s220 + $0x1d8] sm:$0xff]
        %v318 = vld [vmem:[%s220 + $0x1e0] sm:$0xff]
        %v319 = vld [vmem:[%s220 + $0x1e8] sm:$0xff]
        %v320 = vld [vmem:[%s220 + $0x1f0] sm:$0xff]
        %v321 = vld [vmem:[%s220 + $0x1f8] sm:$0xff]
        %v322 = vadd.f32 %v258, %v259
        %323 = vadd.xlane.f32.xlu0 %v322
        %v324 = vpop.xlane.xlu0 %323
        %v325 = vadd.f32 %v260, %v261
        %326 = vadd.xlane.f32.xlu0 %v325
        %v327 = vpop.xlane.xlu0 %326
        %v328 = vadd.f32 %v262, %v263
        %329 = vadd.xlane.f32.xlu0 %v328
        %v330 = vpop.xlane.xlu0 %329
        %v331 = vadd.f32 %v264, %v265
        %332 = vadd.xlane.f32.xlu0 %v331
        %v333 = vpop.xlane.xlu0 %332
        %v334 = vadd.f32 %v266, %v267
        %335 = vadd.xlane.f32.xlu0 %v334
        %v336 = vpop.xlane.xlu0 %335
        %v337 = vadd.f32 %v268, %v269
        %338 = vadd.xlane.f32.xlu0 %v337
        %v339 = vpop.xlane.xlu0 %338
        %v340 = vadd.f32 %v270, %v271
        %341 = vadd.xlane.f32.xlu0 %v340
        %v342 = vpop.xlane.xlu0 %341
        %v343 = vadd.f32 %v272, %v273
        %344 = vadd.xlane.f32.xlu0 %v343
        %v345 = vpop.xlane.xlu0 %344
        %v346 = vadd.f32 %v274, %v275
        %347 = vadd.xlane.f32.xlu0 %v346
        %v348 = vpop.xlane.xlu0 %347
        %v349 = vadd.f32 %v276, %v277
        %350 = vadd.xlane.f32.xlu0 %v349
        %v351 = vpop.xlane.xlu0 %350
        %v352 = vadd.f32 %v278, %v279
        %353 = vadd.xlane.f32.xlu0 %v352
        %v354 = vpop.xlane.xlu0 %353
        %v355 = vadd.f32 %v280, %v281
        %356 = vadd.xlane.f32.xlu0 %v355
        %v357 = vpop.xlane.xlu0 %356
        %v358 = vadd.f32 %v282, %v283
        %359 = vadd.xlane.f32.xlu0 %v358
        %v360 = vpop.xlane.xlu0 %359
        %v361 = vadd.f32 %v284, %v285
        %362 = vadd.xlane.f32.xlu0 %v361
        %v363 = vpop.xlane.xlu0 %362
        %v364 = vadd.f32 %v286, %v287
        %365 = vadd.xlane.f32.xlu0 %v364
        %v366 = vpop.xlane.xlu0 %365
        %v367 = vadd.f32 %v288, %v289
        %368 = vadd.xlane.f32.xlu0 %v367
        %v369 = vpop.xlane.xlu0 %368
        %v370 = vadd.f32 %v290, %v291
        %371 = vadd.xlane.f32.xlu0 %v370
        %v372 = vpop.xlane.xlu0 %371
        %v373 = vadd.f32 %v292, %v293
        %374 = vadd.xlane.f32.xlu0 %v373
        %v375 = vpop.xlane.xlu0 %374
        %v376 = vadd.f32 %v294, %v295
        %377 = vadd.xlane.f32.xlu0 %v376
        %v378 = vpop.xlane.xlu0 %377
        %v379 = vadd.f32 %v296, %v297
        %380 = vadd.xlane.f32.xlu0 %v379
        %v381 = vpop.xlane.xlu0 %380
        %v382 = vadd.f32 %v298, %v299
        %383 = vadd.xlane.f32.xlu0 %v382
        %v384 = vpop.xlane.xlu0 %383
        %v385 = vadd.f32 %v300, %v301
        %386 = vadd.xlane.f32.xlu0 %v385
        %v387 = vpop.xlane.xlu0 %386
        %v388 = vadd.f32 %v302, %v303
        %389 = vadd.xlane.f32.xlu0 %v388
        %v390 = vpop.xlane.xlu0 %389
        %v391 = vadd.f32 %v304, %v305
        %392 = vadd.xlane.f32.xlu0 %v391
        %v393 = vpop.xlane.xlu0 %392
        %v394 = vadd.f32 %v306, %v307
        %395 = vadd.xlane.f32.xlu0 %v394
        %v396 = vpop.xlane.xlu0 %395
        %v397 = vadd.f32 %v308, %v309
        %398 = vadd.xlane.f32.xlu0 %v397
        %v399 = vpop.xlane.xlu0 %398
        %v400 = vadd.f32 %v310, %v311
        %401 = vadd.xlane.f32.xlu0 %v400
        %v402 = vpop.xlane.xlu0 %401
        %v403 = vadd.f32 %v312, %v313
        %404 = vadd.xlane.f32.xlu0 %v403
        %v405 = vpop.xlane.xlu0 %404
        %v406 = vadd.f32 %v314, %v315
        %407 = vadd.xlane.f32.xlu0 %v406
        %v408 = vpop.xlane.xlu0 %407
        %v409 = vadd.f32 %v316, %v317
        %410 = vadd.xlane.f32.xlu0 %v409
        %v411 = vpop.xlane.xlu0 %410
        %v412 = vadd.f32 %v318, %v319
        %413 = vadd.xlane.f32.xlu0 %v412
        %v414 = vpop.xlane.xlu0 %413
        %v415 = vadd.f32 %v320, %v321
        %416 = vadd.xlane.f32.xlu0 %v415
        %v417 = vpop.xlane.xlu0 %416
        %v418 = vmul.f32 %v324, 0.00390625
        %v419 = vmul.f32 %v327, 0.00390625
        %v420 = vmul.f32 %v330, 0.00390625
        %v421 = vmul.f32 %v333, 0.00390625
        %v422 = vmul.f32 %v336, 0.00390625
        %v423 = vmul.f32 %v339, 0.00390625
        %v424 = vmul.f32 %v342, 0.00390625
        %v425 = vmul.f32 %v345, 0.00390625
        %v426 = vmul.f32 %v348, 0.00390625
        %v427 = vmul.f32 %v351, 0.00390625
        %v428 = vmul.f32 %v354, 0.00390625
        %v429 = vmul.f32 %v357, 0.00390625
        %v430 = vmul.f32 %v360, 0.00390625
        %v431 = vmul.f32 %v363, 0.00390625
        %v432 = vmul.f32 %v366, 0.00390625
        %v433 = vmul.f32 %v369, 0.00390625
        %v434 = vmul.f32 %v372, 0.00390625
        %v435 = vmul.f32 %v375, 0.00390625
        %v436 = vmul.f32 %v378, 0.00390625
        %v437 = vmul.f32 %v381, 0.00390625
        %v438 = vmul.f32 %v384, 0.00390625
        %v439 = vmul.f32 %v387, 0.00390625
        %v440 = vmul.f32 %v390, 0.00390625
        %v441 = vmul.f32 %v393, 0.00390625
        %v442 = vmul.f32 %v396, 0.00390625
        %v443 = vmul.f32 %v399, 0.00390625
        %v444 = vmul.f32 %v402, 0.00390625
        %v445 = vmul.f32 %v405, 0.00390625
        %v446 = vmul.f32 %v408, 0.00390625
        %v447 = vmul.f32 %v411, 0.00390625
        %v448 = vmul.f32 %v414, 0.00390625
        %v449 = vmul.f32 %v417, 0.00390625
        %v450 = vadd.f32 %v258, %v260
        %v451 = vadd.f32 %v450, %v262
        %v452 = vadd.f32 %v451, %v264
        %v453 = vrot.slane %v452, 4
        %v454 = vadd.f32 %v452, %v453
        %v455 = vrot.slane %v454, 2
        %v456 = vadd.f32 %v454, %v455
        %v457 = vrot.slane %v456, 1
        %v458 = vadd.f32 %v456, %v457
        %v459 = vadd.f32 %v259, %v261
        %v460 = vadd.f32 %v459, %v263
        %v461 = vadd.f32 %v460, %v265
        %v462 = vrot.slane %v461, 4
        %v463 = vadd.f32 %v461, %v462
        %v464 = vrot.slane %v463, 2
        %v465 = vadd.f32 %v463, %v464
        %v466 = vrot.slane %v465, 1
        %v467 = vadd.f32 %v465, %v466
        %v468 = vadd.f32 %v266, %v268
        %v469 = vadd.f32 %v468, %v270
        %v470 = vadd.f32 %v469, %v272
        %v471 = vrot.slane %v470, 4
        %v472 = vadd.f32 %v470, %v471
        %v473 = vrot.slane %v472, 2
        %v474 = vadd.f32 %v472, %v473
        %v475 = vrot.slane %v474, 1
        %v476 = vadd.f32 %v474, %v475
        %v477 = vadd.f32 %v267, %v269
        %v478 = vadd.f32 %v477, %v271
        %v479 = vadd.f32 %v478, %v273
        %v480 = vrot.slane %v479, 4
        %v481 = vadd.f32 %v479, %v480
        %v482 = vrot.slane %v481, 2
        %v483 = vadd.f32 %v481, %v482
        %v484 = vrot.slane %v483, 1
        %v485 = vadd.f32 %v483, %v484
        %v486 = vadd.f32 %v274, %v276
        %v487 = vadd.f32 %v486, %v278
        %v488 = vadd.f32 %v487, %v280
        %v489 = vrot.slane %v488, 4
        %v490 = vadd.f32 %v488, %v489
        %v491 = vrot.slane %v490, 2
        %v492 = vadd.f32 %v490, %v491
        %v493 = vrot.slane %v492, 1
        %v494 = vadd.f32 %v492, %v493
        %v495 = vadd.f32 %v275, %v277
        %v496 = vadd.f32 %v495, %v279
        %v497 = vadd.f32 %v496, %v281
        %v498 = vrot.slane %v497, 4
        %v499 = vadd.f32 %v497, %v498
        %v500 = vrot.slane %v499, 2
        %v501 = vadd.f32 %v499, %v500
        %v502 = vrot.slane %v501, 1
        %v503 = vadd.f32 %v501, %v502
        %v504 = vadd.f32 %v282, %v284
        %v505 = vadd.f32 %v504, %v286
        %v506 = vadd.f32 %v505, %v288
        %v507 = vrot.slane %v506, 4
        %v508 = vadd.f32 %v506, %v507
        %v509 = vrot.slane %v508, 2
        %v510 = vadd.f32 %v508, %v509
        %v511 = vrot.slane %v510, 1
        %v512 = vadd.f32 %v510, %v511
        %v513 = vadd.f32 %v283, %v285
        %v514 = vadd.f32 %v513, %v287
        %v515 = vadd.f32 %v514, %v289
        %v516 = vrot.slane %v515, 4
        %v517 = vadd.f32 %v515, %v516
        %v518 = vrot.slane %v517, 2
        %v519 = vadd.f32 %v517, %v518
        %v520 = vrot.slane %v519, 1
        %v521 = vadd.f32 %v519, %v520
        %v522 = vadd.f32 %v290, %v292
        %v523 = vadd.f32 %v522, %v294
        %v524 = vadd.f32 %v523, %v296
        %v525 = vrot.slane %v524, 4
        %v526 = vadd.f32 %v524, %v525
        %v527 = vrot.slane %v526, 2
        %v528 = vadd.f32 %v526, %v527
        %v529 = vrot.slane %v528, 1
        %v530 = vadd.f32 %v528, %v529
        %v531 = vadd.f32 %v291, %v293
        %v532 = vadd.f32 %v531, %v295
        %v533 = vadd.f32 %v532, %v297
        %v534 = vrot.slane %v533, 4
        %v535 = vadd.f32 %v533, %v534
        %v536 = vrot.slane %v535, 2
        %v537 = vadd.f32 %v535, %v536
        %v538 = vrot.slane %v537, 1
        %v539 = vadd.f32 %v537, %v538
        %v540 = vadd.f32 %v298, %v300
        %v541 = vadd.f32 %v540, %v302
        %v542 = vadd.f32 %v541, %v304
        %v543 = vrot.slane %v542, 4
        %v544 = vadd.f32 %v542, %v543
        %v545 = vrot.slane %v544, 2
        %v546 = vadd.f32 %v544, %v545
        %v547 = vrot.slane %v546, 1
        %v548 = vadd.f32 %v546, %v547
        %v549 = vadd.f32 %v299, %v301
        %v550 = vadd.f32 %v549, %v303
        %v551 = vadd.f32 %v550, %v305
        %v552 = vrot.slane %v551, 4
        %v553 = vadd.f32 %v551, %v552
        %v554 = vrot.slane %v553, 2
        %v555 = vadd.f32 %v553, %v554
        %v556 = vrot.slane %v555, 1
        %v557 = vadd.f32 %v555, %v556
        %v558 = vadd.f32 %v306, %v308
        %v559 = vadd.f32 %v558, %v310
        %v560 = vadd.f32 %v559, %v312
        %v561 = vrot.slane %v560, 4
        %v562 = vadd.f32 %v560, %v561
        %v563 = vrot.slane %v562, 2
        %v564 = vadd.f32 %v562, %v563
        %v565 = vrot.slane %v564, 1
        %v566 = vadd.f32 %v564, %v565
        %v567 = vadd.f32 %v307, %v309
        %v568 = vadd.f32 %v567, %v311
        %v569 = vadd.f32 %v568, %v313
        %v570 = vrot.slane %v569, 4
        %v571 = vadd.f32 %v569, %v570
        %v572 = vrot.slane %v571, 2
        %v573 = vadd.f32 %v571, %v572
        %v574 = vrot.slane %v573, 1
        %v575 = vadd.f32 %v573, %v574
        %v576 = vadd.f32 %v314, %v316
        %v577 = vadd.f32 %v576, %v318
        %v578 = vadd.f32 %v577, %v320
        %v579 = vrot.slane %v578, 4
        %v580 = vadd.f32 %v578, %v579
        %v581 = vrot.slane %v580, 2
        %v582 = vadd.f32 %v580, %v581
        %v583 = vrot.slane %v582, 1
        %v584 = vadd.f32 %v582, %v583
        %v585 = vadd.f32 %v315, %v317
        %v586 = vadd.f32 %v585, %v319
        %v587 = vadd.f32 %v586, %v321
        %v588 = vrot.slane %v587, 4
        %v589 = vadd.f32 %v587, %v588
        %v590 = vrot.slane %v589, 2
        %v591 = vadd.f32 %v589, %v590
        %v592 = vrot.slane %v591, 1
        %v593 = vadd.f32 %v591, %v592
        %v594 = vmul.f32 %v258, %v258
        %v595 = vmul.f32 %v259, %v259
        %v596 = vmul.f32 %v260, %v260
        %v597 = vmul.f32 %v261, %v261
        %v598 = vmul.f32 %v262, %v262
        %v599 = vmul.f32 %v263, %v263
        %v600 = vmul.f32 %v264, %v264
        %v601 = vmul.f32 %v265, %v265
        %v602 = vmul.f32 %v266, %v266
        %v603 = vmul.f32 %v267, %v267
        %v604 = vmul.f32 %v268, %v268
        %v605 = vmul.f32 %v269, %v269
        %v606 = vmul.f32 %v270, %v270
        %v607 = vmul.f32 %v271, %v271
        %v608 = vmul.f32 %v272, %v272
        %v609 = vmul.f32 %v273, %v273
        %v610 = vmul.f32 %v274, %v274
        %v611 = vmul.f32 %v275, %v275
        %v612 = vmul.f32 %v276, %v276
        %v613 = vmul.f32 %v277, %v277
        %v614 = vmul.f32 %v278, %v278
        %v615 = vmul.f32 %v279, %v279
        %v616 = vmul.f32 %v280, %v280
        %v617 = vmul.f32 %v281, %v281
        %v618 = vmul.f32 %v282, %v282
        %v619 = vmul.f32 %v283, %v283
        %v620 = vmul.f32 %v284, %v284
        %v621 = vmul.f32 %v285, %v285
        %v622 = vmul.f32 %v286, %v286
        %v623 = vmul.f32 %v287, %v287
        %v624 = vmul.f32 %v288, %v288
        %v625 = vmul.f32 %v289, %v289
        %v626 = vmul.f32 %v290, %v290
        %v627 = vmul.f32 %v291, %v291
        %v628 = vmul.f32 %v292, %v292
        %v629 = vmul.f32 %v293, %v293
        %v630 = vmul.f32 %v294, %v294
        %v631 = vmul.f32 %v295, %v295
        %v632 = vmul.f32 %v296, %v296
        %v633 = vmul.f32 %v297, %v297
        %v634 = vmul.f32 %v298, %v298
        %v635 = vmul.f32 %v299, %v299
        %v636 = vmul.f32 %v300, %v300
        %v637 = vmul.f32 %v301, %v301
        %v638 = vmul.f32 %v302, %v302
        %v639 = vmul.f32 %v303, %v303
        %v640 = vmul.f32 %v304, %v304
        %v641 = vmul.f32 %v305, %v305
        %v642 = vmul.f32 %v306, %v306
        %v643 = vmul.f32 %v307, %v307
        %v644 = vmul.f32 %v308, %v308
        %v645 = vmul.f32 %v309, %v309
        %v646 = vmul.f32 %v310, %v310
        %v647 = vmul.f32 %v311, %v311
        %v648 = vmul.f32 %v312, %v312
        %v649 = vmul.f32 %v313, %v313
        %v650 = vmul.f32 %v314, %v314
        %v651 = vmul.f32 %v315, %v315
        %v652 = vmul.f32 %v316, %v316
        %v653 = vmul.f32 %v317, %v317
        %v654 = vmul.f32 %v318, %v318
        %v655 = vmul.f32 %v319, %v319
        %v656 = vmul.f32 %v320, %v320
        %v657 = vmul.f32 %v321, %v321
        %v658 = vadd.f32 %v594, %v596
        %v659 = vadd.f32 %v658, %v598
        %v660 = vadd.f32 %v659, %v600
        %v661 = vrot.slane %v660, 4
        %v662 = vadd.f32 %v660, %v661
        %v663 = vrot.slane %v662, 2
        %v664 = vadd.f32 %v662, %v663
        %v665 = vrot.slane %v664, 1
        %v666 = vadd.f32 %v664, %v665
        %v667 = vadd.f32 %v595, %v597
        %v668 = vadd.f32 %v667, %v599
        %v669 = vadd.f32 %v668, %v601
        %v670 = vrot.slane %v669, 4
        %v671 = vadd.f32 %v669, %v670
        %v672 = vrot.slane %v671, 2
        %v673 = vadd.f32 %v671, %v672
        %v674 = vrot.slane %v673, 1
        %v675 = vadd.f32 %v673, %v674
        %v676 = vadd.f32 %v602, %v604
        %v677 = vadd.f32 %v676, %v606
        %v678 = vadd.f32 %v677, %v608
        %v679 = vrot.slane %v678, 4
        %v680 = vadd.f32 %v678, %v679
        %v681 = vrot.slane %v680, 2
        %v682 = vadd.f32 %v680, %v681
        %v683 = vrot.slane %v682, 1
        %v684 = vadd.f32 %v682, %v683
        %v685 = vadd.f32 %v603, %v605
        %v686 = vadd.f32 %v685, %v607
        %v687 = vadd.f32 %v686, %v609
        %v688 = vrot.slane %v687, 4
        %v689 = vadd.f32 %v687, %v688
        %v690 = vrot.slane %v689, 2
        %v691 = vadd.f32 %v689, %v690
        %v692 = vrot.slane %v691, 1
        %v693 = vadd.f32 %v691, %v692
        %v694 = vadd.f32 %v610, %v612
        %v695 = vadd.f32 %v694, %v614
        %v696 = vadd.f32 %v695, %v616
        %v697 = vrot.slane %v696, 4
        %v698 = vadd.f32 %v696, %v697
        %v699 = vrot.slane %v698, 2
        %v700 = vadd.f32 %v698, %v699
        %v701 = vrot.slane %v700, 1
        %v702 = vadd.f32 %v700, %v701
        %v703 = vadd.f32 %v611, %v613
        %v704 = vadd.f32 %v703, %v615
        %v705 = vadd.f32 %v704, %v617
        %v706 = vrot.slane %v705, 4
        %v707 = vadd.f32 %v705, %v706
        %v708 = vrot.slane %v707, 2
        %v709 = vadd.f32 %v707, %v708
        %v710 = vrot.slane %v709, 1
        %v711 = vadd.f32 %v709, %v710
        %v712 = vadd.f32 %v618, %v620
        %v713 = vadd.f32 %v712, %v622
        %v714 = vadd.f32 %v713, %v624
        %v715 = vrot.slane %v714, 4
        %v716 = vadd.f32 %v714, %v715
        %v717 = vrot.slane %v716, 2
        %v718 = vadd.f32 %v716, %v717
        %v719 = vrot.slane %v718, 1
        %v720 = vadd.f32 %v718, %v719
        %v721 = vadd.f32 %v619, %v621
        %v722 = vadd.f32 %v721, %v623
        %v723 = vadd.f32 %v722, %v625
        %v724 = vrot.slane %v723, 4
        %v725 = vadd.f32 %v723, %v724
        %v726 = vrot.slane %v725, 2
        %v727 = vadd.f32 %v725, %v726
        %v728 = vrot.slane %v727, 1
        %v729 = vadd.f32 %v727, %v728
        %v730 = vadd.f32 %v626, %v628
        %v731 = vadd.f32 %v730, %v630
        %v732 = vadd.f32 %v731, %v632
        %v733 = vrot.slane %v732, 4
        %v734 = vadd.f32 %v732, %v733
        %v735 = vrot.slane %v734, 2
        %v736 = vadd.f32 %v734, %v735
        %v737 = vrot.slane %v736, 1
        %v738 = vadd.f32 %v736, %v737
        %v739 = vadd.f32 %v627, %v629
        %v740 = vadd.f32 %v739, %v631
        %v741 = vadd.f32 %v740, %v633
        %v742 = vrot.slane %v741, 4
        %v743 = vadd.f32 %v741, %v742
        %v744 = vrot.slane %v743, 2
        %v745 = vadd.f32 %v743, %v744
        %v746 = vrot.slane %v745, 1
        %v747 = vadd.f32 %v745, %v746
        %v748 = vadd.f32 %v634, %v636
        %v749 = vadd.f32 %v748, %v638
        %v750 = vadd.f32 %v749, %v640
        %v751 = vrot.slane %v750, 4
        %v752 = vadd.f32 %v750, %v751
        %v753 = vrot.slane %v752, 2
        %v754 = vadd.f32 %v752, %v753
        %v755 = vrot.slane %v754, 1
        %v756 = vadd.f32 %v754, %v755
        %v757 = vadd.f32 %v635, %v637
        %v758 = vadd.f32 %v757, %v639
        %v759 = vadd.f32 %v758, %v641
        %v760 = vrot.slane %v759, 4
        %v761 = vadd.f32 %v759, %v760
        %v762 = vrot.slane %v761, 2
        %v763 = vadd.f32 %v761, %v762
        %v764 = vrot.slane %v763, 1
        %v765 = vadd.f32 %v763, %v764
        %v766 = vadd.f32 %v642, %v644
        %v767 = vadd.f32 %v766, %v646
        %v768 = vadd.f32 %v767, %v648
        %v769 = vrot.slane %v768, 4
        %v770 = vadd.f32 %v768, %v769
        %v771 = vrot.slane %v770, 2
        %v772 = vadd.f32 %v770, %v771
        %v773 = vrot.slane %v772, 1
        %v774 = vadd.f32 %v772, %v773
        %v775 = vadd.f32 %v643, %v645
        %v776 = vadd.f32 %v775, %v647
        %v777 = vadd.f32 %v776, %v649
        %v778 = vrot.slane %v777, 4
        %v779 = vadd.f32 %v777, %v778
        %v780 = vrot.slane %v779, 2
        %v781 = vadd.f32 %v779, %v780
        %v782 = vrot.slane %v781, 1
        %v783 = vadd.f32 %v781, %v782
        %v784 = vadd.f32 %v650, %v652
        %v785 = vadd.f32 %v784, %v654
        %v786 = vadd.f32 %v785, %v656
        %v787 = vrot.slane %v786, 4
        %v788 = vadd.f32 %v786, %v787
        %v789 = vrot.slane %v788, 2
        %v790 = vadd.f32 %v788, %v789
        %v791 = vrot.slane %v790, 1
        %v792 = vadd.f32 %v790, %v791
        %v793 = vadd.f32 %v651, %v653
        %v794 = vadd.f32 %v793, %v655
        %v795 = vadd.f32 %v794, %v657
        %v796 = vrot.slane %v795, 4
        %v797 = vadd.f32 %v795, %v796
        %v798 = vrot.slane %v797, 2
        %v799 = vadd.f32 %v797, %v798
        %v800 = vrot.slane %v799, 1
        %v801 = vadd.f32 %v799, %v800
        %v802 = vmul.f32 %v458, 0.03125
        %v803 = vmul.f32 %v467, 0.03125
        %v804 = vmul.f32 %v476, 0.03125
        %v805 = vmul.f32 %v485, 0.03125
        %v806 = vmul.f32 %v494, 0.03125
        %v807 = vmul.f32 %v503, 0.03125
        %v808 = vmul.f32 %v512, 0.03125
        %v809 = vmul.f32 %v521, 0.03125
        %v810 = vmul.f32 %v530, 0.03125
        %v811 = vmul.f32 %v539, 0.03125
        %v812 = vmul.f32 %v548, 0.03125
        %v813 = vmul.f32 %v557, 0.03125
        %v814 = vmul.f32 %v566, 0.03125
        %v815 = vmul.f32 %v575, 0.03125
        %v816 = vmul.f32 %v584, 0.03125
        %v817 = vmul.f32 %v593, 0.03125
        %v818 = vmul.f32 %v666, 0.03125
        %v819 = vmul.f32 %v675, 0.03125
        %v820 = vmul.f32 %v684, 0.03125
        %v821 = vmul.f32 %v693, 0.03125
        %v822 = vmul.f32 %v702, 0.03125
        %v823 = vmul.f32 %v711, 0.03125
        %v824 = vmul.f32 %v720, 0.03125
        %v825 = vmul.f32 %v729, 0.03125
        %v826 = vmul.f32 %v738, 0.03125
        %v827 = vmul.f32 %v747, 0.03125
        %v828 = vmul.f32 %v756, 0.03125
        %v829 = vmul.f32 %v765, 0.03125
        %v830 = vmul.f32 %v774, 0.03125
        %v831 = vmul.f32 %v783, 0.03125
        %v832 = vmul.f32 %v792, 0.03125
        %v833 = vmul.f32 %v801, 0.03125
        %v834 = vmul.f32 %v802, %v802
        %v835 = vmul.f32 %v803, %v803
        %v836 = vmul.f32 %v804, %v804
        %v837 = vmul.f32 %v805, %v805
        %v838 = vmul.f32 %v806, %v806
        %v839 = vmul.f32 %v807, %v807
        %v840 = vmul.f32 %v808, %v808
        %v841 = vmul.f32 %v809, %v809
        %v842 = vmul.f32 %v810, %v810
        %v843 = vmul.f32 %v811, %v811
        %v844 = vmul.f32 %v812, %v812
        %v845 = vmul.f32 %v813, %v813
        %v846 = vmul.f32 %v814, %v814
        %v847 = vmul.f32 %v815, %v815
        %v848 = vmul.f32 %v816, %v816
        %v849 = vmul.f32 %v817, %v817
        %v850 = vsub.f32 %v818, %v834
        %v851 = vsub.f32 %v819, %v835
        %v852 = vsub.f32 %v820, %v836
        %v853 = vsub.f32 %v821, %v837
        %v854 = vsub.f32 %v822, %v838
        %v855 = vsub.f32 %v823, %v839
        %v856 = vsub.f32 %v824, %v840
        %v857 = vsub.f32 %v825, %v841
        %v858 = vsub.f32 %v826, %v842
        %v859 = vsub.f32 %v827, %v843
        %v860 = vsub.f32 %v828, %v844
        %v861 = vsub.f32 %v829, %v845
        %v862 = vsub.f32 %v830, %v846
        %v863 = vsub.f32 %v831, %v847
        %v864 = vsub.f32 %v832, %v848
        %v865 = vsub.f32 %v833, %v849
        %v866 = vmax.f32 %v850, 0.0
        %v867 = vmax.f32 %v851, 0.0
        %v868 = vmax.f32 %v852, 0.0
        %v869 = vmax.f32 %v853, 0.0
        %v870 = vmax.f32 %v854, 0.0
        %v871 = vmax.f32 %v855, 0.0
        %v872 = vmax.f32 %v856, 0.0
        %v873 = vmax.f32 %v857, 0.0
        %v874 = vmax.f32 %v858, 0.0
        %v875 = vmax.f32 %v859, 0.0
        %v876 = vmax.f32 %v860, 0.0
        %v877 = vmax.f32 %v861, 0.0
        %v878 = vmax.f32 %v862, 0.0
        %v879 = vmax.f32 %v863, 0.0
        %v880 = vmax.f32 %v864, 0.0
        %v881 = vmax.f32 %v865, 0.0
        %v882 = vadd.f32 %v866, 1e-06
        %v883 = vadd.f32 %v867, 1e-06
        %v884 = vadd.f32 %v868, 1e-06
        %v885 = vadd.f32 %v869, 1e-06
        %v886 = vadd.f32 %v870, 1e-06
        %v887 = vadd.f32 %v871, 1e-06
        %v888 = vadd.f32 %v872, 1e-06
        %v889 = vadd.f32 %v873, 1e-06
        %v890 = vadd.f32 %v874, 1e-06
        %v891 = vadd.f32 %v875, 1e-06
        %v892 = vadd.f32 %v876, 1e-06
        %v893 = vadd.f32 %v877, 1e-06
        %v894 = vadd.f32 %v878, 1e-06
        %v895 = vadd.f32 %v879, 1e-06
        %v896 = vadd.f32 %v880, 1e-06
        %v897 = vadd.f32 %v881, 1e-06
        %v898 = vrsqrt.pop %v882
        %v899 = vrsqrt.pop %v883
        %v900 = vrsqrt.pop %v884
        %v901 = vrsqrt.pop %v885
        %v902 = vrsqrt.pop %v886
        %v903 = vrsqrt.pop %v887
        %v904 = vrsqrt.pop %v888
        %v905 = vrsqrt.pop %v889
        %v906 = vrsqrt.pop %v890
        %v907 = vrsqrt.pop %v891
        %v908 = vrsqrt.pop %v892
        %v909 = vrsqrt.pop %v893
        %v910 = vrsqrt.pop %v894
        %v911 = vrsqrt.pop %v895
        %v912 = vrsqrt.pop %v896
        %v913 = vrsqrt.pop %v897
        %v914 = vld [vmem:[#allocation8] sm:$0xff]
        %v915 = vld [vmem:[#allocation8 + $0x8] sm:$0xff]
        %v916 = vld [vmem:[#allocation8 + $0x10] sm:$0xff]
        %v917 = vld [vmem:[#allocation8 + $0x18] sm:$0xff]
        %v950 = vlaneseq
        %v951 = vand.u32 %v950, 127
        %v952 = vlaneseq
        %v953 = vshrl.u32 %v952, 7
        %v954 = vsub.s32 %v951, %v953
        %v955 = vrot.slane %v418, %v954
        %v956 = vadd.s32 %v951, 4294967288
        %v957 = vlaneseq
        %v958 = vshrl.u32 %v957, 7
        %v959 = vsub.s32 %v956, %v958
        %v960 = vrot.slane %v419, %v959
        %vm961 = vcmask 130112
        %v962 = vsel %vm961, %v960, %v955
        %v963 = vadd.s32 %v951, 4294967280
        %v964 = vlaneseq
        %v965 = vshrl.u32 %v964, 7
        %v966 = vsub.s32 %v963, %v965
        %v967 = vrot.slane %v420, %v966
        %vm968 = vcmask 195712
        %v969 = vsel %vm968, %v967, %v962
        %v970 = vadd.s32 %v951, 4294967272
        %v971 = vlaneseq
        %v972 = vshrl.u32 %v971, 7
        %v973 = vsub.s32 %v970, %v972
        %v974 = vrot.slane %v421, %v973
        %vm975 = vcmask 261312
        %v976 = vsel %vm975, %v974, %v969
        %v977 = vlaneseq
        %v978 = vshrl.u32 %v977, 7
        %v979 = vsub.s32 %v951, %v978
        %v980 = vrot.slane %v422, %v979
        %v981 = vlaneseq
        %v982 = vshrl.u32 %v981, 7
        %v983 = vsub.s32 %v956, %v982
        %v984 = vrot.slane %v423, %v983
        %v985 = vsel %vm961, %v984, %v980
        %v986 = vlaneseq
        %v987 = vshrl.u32 %v986, 7
        %v988 = vsub.s32 %v963, %v987
        %v989 = vrot.slane %v424, %v988
        %v990 = vsel %vm968, %v989, %v985
        %v991 = vlaneseq
        %v992 = vshrl.u32 %v991, 7
        %v993 = vsub.s32 %v970, %v992
        %v994 = vrot.slane %v425, %v993
        %v995 = vsel %vm975, %v994, %v990
        %v996 = vlaneseq
        %v997 = vshrl.u32 %v996, 7
        %v998 = vsub.s32 %v951, %v997
        %v999 = vrot.slane %v426, %v998
        %v1000 = vlaneseq
        %v1001 = vshrl.u32 %v1000, 7
        %v1002 = vsub.s32 %v956, %v1001
        %v1003 = vrot.slane %v427, %v1002
        %v1004 = vsel %vm961, %v1003, %v999
        %v1005 = vlaneseq
        %v1006 = vshrl.u32 %v1005, 7
        %v1007 = vsub.s32 %v963, %v1006
        %v1008 = vrot.slane %v428, %v1007
        %v1009 = vsel %vm968, %v1008, %v1004
        %v1010 = vlaneseq
        %v1011 = vshrl.u32 %v1010, 7
        %v1012 = vsub.s32 %v970, %v1011
        %v1013 = vrot.slane %v429, %v1012
        %v1014 = vsel %vm975, %v1013, %v1009
        %v1015 = vlaneseq
        %v1016 = vshrl.u32 %v1015, 7
        %v1017 = vsub.s32 %v951, %v1016
        %v1018 = vrot.slane %v430, %v1017
        %v1019 = vlaneseq
        %v1020 = vshrl.u32 %v1019, 7
        %v1021 = vsub.s32 %v956, %v1020
        %v1022 = vrot.slane %v431, %v1021
        %v1023 = vsel %vm961, %v1022, %v1018
        %v1024 = vlaneseq
        %v1025 = vshrl.u32 %v1024, 7
        %v1026 = vsub.s32 %v963, %v1025
        %v1027 = vrot.slane %v432, %v1026
        %v1028 = vsel %vm968, %v1027, %v1023
        %v1029 = vlaneseq
        %v1030 = vshrl.u32 %v1029, 7
        %v1031 = vsub.s32 %v970, %v1030
        %v1032 = vrot.slane %v433, %v1031
        %v1033 = vsel %vm975, %v1032, %v1028
        %v1034 = vlaneseq
        %v1035 = vshrl.u32 %v1034, 7
        %v1036 = vsub.s32 %v951, %v1035
        %v1037 = vrot.slane %v434, %v1036
        %v1038 = vlaneseq
        %v1039 = vshrl.u32 %v1038, 7
        %v1040 = vsub.s32 %v956, %v1039
        %v1041 = vrot.slane %v435, %v1040
        %v1042 = vsel %vm961, %v1041, %v1037
        %v1043 = vlaneseq
        %v1044 = vshrl.u32 %v1043, 7
        %v1045 = vsub.s32 %v963, %v1044
        %v1046 = vrot.slane %v436, %v1045
        %v1047 = vsel %vm968, %v1046, %v1042
        %v1048 = vlaneseq
        %v1049 = vshrl.u32 %v1048, 7
        %v1050 = vsub.s32 %v970, %v1049
        %v1051 = vrot.slane %v437, %v1050
        %v1052 = vsel %vm975, %v1051, %v1047
        %v1053 = vlaneseq
        %v1054 = vshrl.u32 %v1053, 7
        %v1055 = vsub.s32 %v951, %v1054
        %v1056 = vrot.slane %v438, %v1055
        %v1057 = vlaneseq
        %v1058 = vshrl.u32 %v1057, 7
        %v1059 = vsub.s32 %v956, %v1058
        %v1060 = vrot.slane %v439, %v1059
        %v1061 = vsel %vm961, %v1060, %v1056
        %v1062 = vlaneseq
        %v1063 = vshrl.u32 %v1062, 7
        %v1064 = vsub.s32 %v963, %v1063
        %v1065 = vrot.slane %v440, %v1064
        %v1066 = vsel %vm968, %v1065, %v1061
        %v1067 = vlaneseq
        %v1068 = vshrl.u32 %v1067, 7
        %v1069 = vsub.s32 %v970, %v1068
        %v1070 = vrot.slane %v441, %v1069
        %v1071 = vsel %vm975, %v1070, %v1066
        %v1072 = vlaneseq
        %v1073 = vshrl.u32 %v1072, 7
        %v1074 = vsub.s32 %v951, %v1073
        %v1075 = vrot.slane %v442, %v1074
        %v1076 = vlaneseq
        %v1077 = vshrl.u32 %v1076, 7
        %v1078 = vsub.s32 %v956, %v1077
        %v1079 = vrot.slane %v443, %v1078
        %v1080 = vsel %vm961, %v1079, %v1075
        %v1081 = vlaneseq
        %v1082 = vshrl.u32 %v1081, 7
        %v1083 = vsub.s32 %v963, %v1082
        %v1084 = vrot.slane %v444, %v1083
        %v1085 = vsel %vm968, %v1084, %v1080
        %v1086 = vlaneseq
        %v1087 = vshrl.u32 %v1086, 7
        %v1088 = vsub.s32 %v970, %v1087
        %v1089 = vrot.slane %v445, %v1088
        %v1090 = vsel %vm975, %v1089, %v1085
        %v1091 = vlaneseq
        %v1092 = vshrl.u32 %v1091, 7
        %v1093 = vsub.s32 %v951, %v1092
        %v1094 = vrot.slane %v446, %v1093
        %v1095 = vlaneseq
        %v1096 = vshrl.u32 %v1095, 7
        %v1097 = vsub.s32 %v956, %v1096
        %v1098 = vrot.slane %v447, %v1097
        %v1099 = vsel %vm961, %v1098, %v1094
        %v1100 = vlaneseq
        %v1101 = vshrl.u32 %v1100, 7
        %v1102 = vsub.s32 %v963, %v1101
        %v1103 = vrot.slane %v448, %v1102
        %v1104 = vsel %vm968, %v1103, %v1099
        %v1105 = vlaneseq
        %v1106 = vshrl.u32 %v1105, 7
        %v1107 = vsub.s32 %v970, %v1106
        %v1108 = vrot.slane %v449, %v1107
        %v1109 = vsel %vm975, %v1108, %v1104
        %vm1110 = vcmask 1041409
        %v1111 = vsel %vm1110, %v995, %v976
        %vm1112 = vcmask 1042434
        %v1113 = vsel %vm1112, %v1014, %v1111
        %vm1114 = vcmask 1043459
        %v1115 = vsel %vm1114, %v1033, %v1113
        %vm1116 = vcmask 1044484
        %v1117 = vsel %vm1116, %v1052, %v1115
        %vm1118 = vcmask 1045509
        %v1119 = vsel %vm1118, %v1071, %v1117
        %vm1120 = vcmask 1046534
        %v1121 = vsel %vm1120, %v1090, %v1119
        %vm1122 = vcmask 1047559
        %v1123 = vsel %vm1122, %v1109, %v1121
        %vm1124 = vcmask 261120
        %v1125 = vsel %vm1124, %v1123, 0
        %1127 = vmatprep.subr.mxu0 0.0
        %1128 = vmatpush1.msra.mxu0 %v914
        %1129 = vmatprep.subr.mxu0 0.0
        %1130 = vmatpush1.msra.mxu0 %v915
        %1131 = vmatprep.subr.mxu0 0.0
        %1132 = vmatpush1.msra.mxu0 %v916
        %1133 = vmatprep.subr.mxu0 0.0
        %1134 = vmatpush1.msra.mxu0 %v917
        %1135 = vmatprep.subr.mxu0 0.0
        %1136 = vmatpush1.msra.mxu0 0.0
        %1137 = vmatprep.subr.mxu0 0.0
        %1138 = vmatpush1.msra.mxu0 0.0
        %1139 = vmatprep.subr.mxu0 0.0
        %1140 = vmatpush1.msra.mxu0 0.0
        %1141 = vmatprep.subr.mxu0 0.0
        %1142 = vmatpush1.msra.mxu0 0.0
        %1143 = vmatprep.subr.mxu0 0.0
        %1144 = vmatpush1.msra.mxu0 0.0
        %1145 = vmatprep.subr.mxu0 0.0
        %1146 = vmatpush1.msra.mxu0 0.0
        %1147 = vmatprep.subr.mxu0 0.0
        %1148 = vmatpush1.msra.mxu0 0.0
        %1149 = vmatprep.subr.mxu0 0.0
        %1150 = vmatpush1.msra.mxu0 0.0
        %1151 = vmatprep.subr.mxu0 0.0
        %1152 = vmatpush1.msra.mxu0 0.0
        %1153 = vmatprep.subr.mxu0 0.0
        %1154 = vmatpush1.msra.mxu0 0.0
        %1155 = vmatprep.subr.mxu0 0.0
        %1156 = vmatpush1.msra.mxu0 0.0
        %1157 = vmatprep.subr.mxu0 0.0
        %1158 = vmatpush1.msra.mxu0 0.0
        %1159 = vmatprep.subr.mxu0 0.0
        %1160 = vmatpush1.msra.mxu0 0.0
        %1161 = vmatprep.subr.mxu0 0.0
        %1162 = vmatpush1.msra.mxu0 0.0
        %1163 = vmatprep.subr.mxu0 0.0
        %1164 = vmatpush1.msra.mxu0 0.0
        %1165 = vmatprep.subr.mxu0 0.0
        %1166 = vmatpush1.msra.mxu0 0.0
        %1167 = vmatprep.subr.mxu0 0.0
        %1168 = vmatpush1.msra.mxu0 0.0
        %1169 = vmatprep.subr.mxu0 0.0
        %1170 = vmatpush1.msra.mxu0 0.0
        %1171 = vmatprep.subr.mxu0 0.0
        %1172 = vmatpush1.msra.mxu0 0.0
        %1173 = vmatprep.subr.mxu0 0.0
        %1174 = vmatpush1.msra.mxu0 0.0
        %1175 = vmatprep.subr.mxu0 0.0
        %1176 = vmatpush1.msra.mxu0 0.0
        %1177 = vmatprep.subr.mxu0 0.0
        %1178 = vmatpush1.msra.mxu0 0.0
        %1179 = vmatprep.subr.mxu0 0.0
        %1180 = vmatpush1.msra.mxu0 0.0
        %1181 = vmatprep.subr.mxu0 0.0
        %1182 = vmatpush1.msra.mxu0 0.0
        %1183 = vmatprep.subr.mxu0 0.0
        %1184 = vmatpush1.msra.mxu0 0.0
        %1185 = vmatprep.subr.mxu0 0.0
        %1186 = vmatpush1.msra.mxu0 0.0
        %1187 = vmatprep.subr.mxu0 0.0
        %1188 = vmatpush1.msra.mxu0 0.0
        %1189 = vmatprep.subr.mxu0 0.0
        %1190 = vmatpush1.msra.mxu0 0.0
        %1191 = vmatprep.mubr.f32.mxu0 0.0
        %1192 = vmatmul.mubr.f32.gmra.mrb[0].mxu0 %v1125
        %v1193 = vpop.f32.mrb[0].mxu0
        %v1194 = vadd.f32 0.0, %v1193
        %v1195 = vpop.f32.mrb[0].mxu0
        %1196 = vdwg.mxu0
        %v1197 = vsel %vm1124, %v1194, 0.0
        %1198 = vadd.xlane.f32.xlu0 %v1197
        %v1199 = vpop.xlane.xlu0 %1198
        %v1200 = vlaneseq
        %v1201 = vshrl.u32 %v1200, 7
        %v1202 = vsub.s32 0, %v1201
        %v1203 = vrot.slane %v1194, %v1202
        %1205 = vbcast.lane.b32.xlu0 %v1203, 256
        %v1206 = vpop.permute.xlu0 %1205
        %s1208 = sor.u32 256, 8
        %1209 = vbcast.lane.b32.xlu0 %v1203, %s1208
        %v1210 = vpop.permute.xlu0 %1209
        %s1212 = sor.u32 256, 16
        %1213 = vbcast.lane.b32.xlu0 %v1203, %s1212
        %v1214 = vpop.permute.xlu0 %1213
        %s1216 = sor.u32 256, 24
        %1217 = vbcast.lane.b32.xlu0 %v1203, %s1216
        %v1218 = vpop.permute.xlu0 %1217
        %v1219 = vlaneseq
        %v1220 = vshrl.u32 %v1219, 7
        %v1221 = vsub.s32 1, %v1220
        %v1222 = vrot.slane %v1194, %v1221
        %1224 = vbcast.lane.b32.xlu0 %v1222, 256
        %v1225 = vpop.permute.xlu0 %1224
        %s1227 = sor.u32 256, 8
        %1228 = vbcast.lane.b32.xlu0 %v1222, %s1227
        %v1229 = vpop.permute.xlu0 %1228
        %s1231 = sor.u32 256, 16
        %1232 = vbcast.lane.b32.xlu0 %v1222, %s1231
        %v1233 = vpop.permute.xlu0 %1232
        %s1235 = sor.u32 256, 24
        %1236 = vbcast.lane.b32.xlu0 %v1222, %s1235
        %v1237 = vpop.permute.xlu0 %1236
        %v1238 = vlaneseq
        %v1239 = vshrl.u32 %v1238, 7
        %v1240 = vsub.s32 2, %v1239
        %v1241 = vrot.slane %v1194, %v1240
        %1243 = vbcast.lane.b32.xlu0 %v1241, 256
        %v1244 = vpop.permute.xlu0 %1243
        %s1246 = sor.u32 256, 8
        %1247 = vbcast.lane.b32.xlu0 %v1241, %s1246
        %v1248 = vpop.permute.xlu0 %1247
        %s1250 = sor.u32 256, 16
        %1251 = vbcast.lane.b32.xlu0 %v1241, %s1250
        %v1252 = vpop.permute.xlu0 %1251
        %s1254 = sor.u32 256, 24
        %1255 = vbcast.lane.b32.xlu0 %v1241, %s1254
        %v1256 = vpop.permute.xlu0 %1255
        %v1257 = vlaneseq
        %v1258 = vshrl.u32 %v1257, 7
        %v1259 = vsub.s32 3, %v1258
        %v1260 = vrot.slane %v1194, %v1259
        %1262 = vbcast.lane.b32.xlu0 %v1260, 256
        %v1263 = vpop.permute.xlu0 %1262
        %s1265 = sor.u32 256, 8
        %1266 = vbcast.lane.b32.xlu0 %v1260, %s1265
        %v1267 = vpop.permute.xlu0 %1266
        %s1269 = sor.u32 256, 16
        %1270 = vbcast.lane.b32.xlu0 %v1260, %s1269
        %v1271 = vpop.permute.xlu0 %1270
        %s1273 = sor.u32 256, 24
        %1274 = vbcast.lane.b32.xlu0 %v1260, %s1273
        %v1275 = vpop.permute.xlu0 %1274
        %v1276 = vlaneseq
        %v1277 = vshrl.u32 %v1276, 7
        %v1278 = vsub.s32 4, %v1277
        %v1279 = vrot.slane %v1194, %v1278
        %1281 = vbcast.lane.b32.xlu0 %v1279, 256
        %v1282 = vpop.permute.xlu0 %1281
        %s1284 = sor.u32 256, 8
        %1285 = vbcast.lane.b32.xlu0 %v1279, %s1284
        %v1286 = vpop.permute.xlu0 %1285
        %s1288 = sor.u32 256, 16
        %1289 = vbcast.lane.b32.xlu0 %v1279, %s1288
        %v1290 = vpop.permute.xlu0 %1289
        %s1292 = sor.u32 256, 24
        %1293 = vbcast.lane.b32.xlu0 %v1279, %s1292
        %v1294 = vpop.permute.xlu0 %1293
        %v1295 = vlaneseq
        %v1296 = vshrl.u32 %v1295, 7
        %v1297 = vsub.s32 5, %v1296
        %v1298 = vrot.slane %v1194, %v1297
        %1300 = vbcast.lane.b32.xlu0 %v1298, 256
        %v1301 = vpop.permute.xlu0 %1300
        %s1303 = sor.u32 256, 8
        %1304 = vbcast.lane.b32.xlu0 %v1298, %s1303
        %v1305 = vpop.permute.xlu0 %1304
        %s1307 = sor.u32 256, 16
        %1308 = vbcast.lane.b32.xlu0 %v1298, %s1307
        %v1309 = vpop.permute.xlu0 %1308
        %s1311 = sor.u32 256, 24
        %1312 = vbcast.lane.b32.xlu0 %v1298, %s1311
        %v1313 = vpop.permute.xlu0 %1312
        %v1314 = vlaneseq
        %v1315 = vshrl.u32 %v1314, 7
        %v1316 = vsub.s32 6, %v1315
        %v1317 = vrot.slane %v1194, %v1316
        %1319 = vbcast.lane.b32.xlu0 %v1317, 256
        %v1320 = vpop.permute.xlu0 %1319
        %s1322 = sor.u32 256, 8
        %1323 = vbcast.lane.b32.xlu0 %v1317, %s1322
        %v1324 = vpop.permute.xlu0 %1323
        %s1326 = sor.u32 256, 16
        %1327 = vbcast.lane.b32.xlu0 %v1317, %s1326
        %v1328 = vpop.permute.xlu0 %1327
        %s1330 = sor.u32 256, 24
        %1331 = vbcast.lane.b32.xlu0 %v1317, %s1330
        %v1332 = vpop.permute.xlu0 %1331
        %v1333 = vlaneseq
        %v1334 = vshrl.u32 %v1333, 7
        %v1335 = vsub.s32 7, %v1334
        %v1336 = vrot.slane %v1194, %v1335
        %1338 = vbcast.lane.b32.xlu0 %v1336, 256
        %v1339 = vpop.permute.xlu0 %1338
        %s1341 = sor.u32 256, 8
        %1342 = vbcast.lane.b32.xlu0 %v1336, %s1341
        %v1343 = vpop.permute.xlu0 %1342
        %s1345 = sor.u32 256, 16
        %1346 = vbcast.lane.b32.xlu0 %v1336, %s1345
        %v1347 = vpop.permute.xlu0 %1346
        %s1349 = sor.u32 256, 24
        %1350 = vbcast.lane.b32.xlu0 %v1336, %s1349
        %v1351 = vpop.permute.xlu0 %1350
        %v1352 = vmul.f32 %v1206, %v258
        %v1353 = vmul.f32 %v1206, %v259
        %v1354 = vmul.f32 %v1210, %v260
        %v1355 = vmul.f32 %v1210, %v261
        %v1356 = vmul.f32 %v1214, %v262
        %v1357 = vmul.f32 %v1214, %v263
        %v1358 = vmul.f32 %v1218, %v264
        %v1359 = vmul.f32 %v1218, %v265
        %v1360 = vmul.f32 %v1225, %v266
        %v1361 = vmul.f32 %v1225, %v267
        %v1362 = vmul.f32 %v1229, %v268
        %v1363 = vmul.f32 %v1229, %v269
        %v1364 = vmul.f32 %v1233, %v270
        %v1365 = vmul.f32 %v1233, %v271
        %v1366 = vmul.f32 %v1237, %v272
        %v1367 = vmul.f32 %v1237, %v273
        %v1368 = vmul.f32 %v1244, %v274
        %v1369 = vmul.f32 %v1244, %v275
        %v1370 = vmul.f32 %v1248, %v276
        %v1371 = vmul.f32 %v1248, %v277
        %v1372 = vmul.f32 %v1252, %v278
        %v1373 = vmul.f32 %v1252, %v279
        %v1374 = vmul.f32 %v1256, %v280
        %v1375 = vmul.f32 %v1256, %v281
        %v1376 = vmul.f32 %v1263, %v282
        %v1377 = vmul.f32 %v1263, %v283
        %v1378 = vmul.f32 %v1267, %v284
        %v1379 = vmul.f32 %v1267, %v285
        %v1380 = vmul.f32 %v1271, %v286
        %v1381 = vmul.f32 %v1271, %v287
        %v1382 = vmul.f32 %v1275, %v288
        %v1383 = vmul.f32 %v1275, %v289
        %v1384 = vmul.f32 %v1282, %v290
        %v1385 = vmul.f32 %v1282, %v291
        %v1386 = vmul.f32 %v1286, %v292
        %v1387 = vmul.f32 %v1286, %v293
        %v1388 = vmul.f32 %v1290, %v294
        %v1389 = vmul.f32 %v1290, %v295
        %v1390 = vmul.f32 %v1294, %v296
        %v1391 = vmul.f32 %v1294, %v297
        %v1392 = vmul.f32 %v1301, %v298
        %v1393 = vmul.f32 %v1301, %v299
        %v1394 = vmul.f32 %v1305, %v300
        %v1395 = vmul.f32 %v1305, %v301
        %v1396 = vmul.f32 %v1309, %v302
        %v1397 = vmul.f32 %v1309, %v303
        %v1398 = vmul.f32 %v1313, %v304
        %v1399 = vmul.f32 %v1313, %v305
        %v1400 = vmul.f32 %v1320, %v306
        %v1401 = vmul.f32 %v1320, %v307
        %v1402 = vmul.f32 %v1324, %v308
        %v1403 = vmul.f32 %v1324, %v309
        %v1404 = vmul.f32 %v1328, %v310
        %v1405 = vmul.f32 %v1328, %v311
        %v1406 = vmul.f32 %v1332, %v312
        %v1407 = vmul.f32 %v1332, %v313
        %v1408 = vmul.f32 %v1339, %v314
        %v1409 = vmul.f32 %v1339, %v315
        %v1410 = vmul.f32 %v1343, %v316
        %v1411 = vmul.f32 %v1343, %v317
        %v1412 = vmul.f32 %v1347, %v318
        %v1413 = vmul.f32 %v1347, %v319
        %v1414 = vmul.f32 %v1351, %v320
        %v1415 = vmul.f32 %v1351, %v321
        %v1416 = vadd.f32 %v1352, %v1354
        %v1417 = vadd.f32 %v1416, %v1356
        %v1418 = vadd.f32 %v1417, %v1358
        %v1419 = vrot.slane %v1418, 4
        %v1420 = vadd.f32 %v1418, %v1419
        %v1421 = vrot.slane %v1420, 2
        %v1422 = vadd.f32 %v1420, %v1421
        %v1423 = vrot.slane %v1422, 1
        %v1424 = vadd.f32 %v1422, %v1423
        %v1425 = vadd.f32 %v1353, %v1355
        %v1426 = vadd.f32 %v1425, %v1357
        %v1427 = vadd.f32 %v1426, %v1359
        %v1428 = vrot.slane %v1427, 4
        %v1429 = vadd.f32 %v1427, %v1428
        %v1430 = vrot.slane %v1429, 2
        %v1431 = vadd.f32 %v1429, %v1430
        %v1432 = vrot.slane %v1431, 1
        %v1433 = vadd.f32 %v1431, %v1432
        %v1434 = vadd.f32 %v1360, %v1362
        %v1435 = vadd.f32 %v1434, %v1364
        %v1436 = vadd.f32 %v1435, %v1366
        %v1437 = vrot.slane %v1436, 4
        %v1438 = vadd.f32 %v1436, %v1437
        %v1439 = vrot.slane %v1438, 2
        %v1440 = vadd.f32 %v1438, %v1439
        %v1441 = vrot.slane %v1440, 1
        %v1442 = vadd.f32 %v1440, %v1441
        %v1443 = vadd.f32 %v1361, %v1363
        %v1444 = vadd.f32 %v1443, %v1365
        %v1445 = vadd.f32 %v1444, %v1367
        %v1446 = vrot.slane %v1445, 4
        %v1447 = vadd.f32 %v1445, %v1446
        %v1448 = vrot.slane %v1447, 2
        %v1449 = vadd.f32 %v1447, %v1448
        %v1450 = vrot.slane %v1449, 1
        %v1451 = vadd.f32 %v1449, %v1450
        %v1452 = vadd.f32 %v1368, %v1370
        %v1453 = vadd.f32 %v1452, %v1372
        %v1454 = vadd.f32 %v1453, %v1374
        %v1455 = vrot.slane %v1454, 4
        %v1456 = vadd.f32 %v1454, %v1455
        %v1457 = vrot.slane %v1456, 2
        %v1458 = vadd.f32 %v1456, %v1457
        %v1459 = vrot.slane %v1458, 1
        %v1460 = vadd.f32 %v1458, %v1459
        %v1461 = vadd.f32 %v1369, %v1371
        %v1462 = vadd.f32 %v1461, %v1373
        %v1463 = vadd.f32 %v1462, %v1375
        %v1464 = vrot.slane %v1463, 4
        %v1465 = vadd.f32 %v1463, %v1464
        %v1466 = vrot.slane %v1465, 2
        %v1467 = vadd.f32 %v1465, %v1466
        %v1468 = vrot.slane %v1467, 1
        %v1469 = vadd.f32 %v1467, %v1468
        %v1470 = vadd.f32 %v1376, %v1378
        %v1471 = vadd.f32 %v1470, %v1380
        %v1472 = vadd.f32 %v1471, %v1382
        %v1473 = vrot.slane %v1472, 4
        %v1474 = vadd.f32 %v1472, %v1473
        %v1475 = vrot.slane %v1474, 2
        %v1476 = vadd.f32 %v1474, %v1475
        %v1477 = vrot.slane %v1476, 1
        %v1478 = vadd.f32 %v1476, %v1477
        %v1479 = vadd.f32 %v1377, %v1379
        %v1480 = vadd.f32 %v1479, %v1381
        %v1481 = vadd.f32 %v1480, %v1383
        %v1482 = vrot.slane %v1481, 4
        %v1483 = vadd.f32 %v1481, %v1482
        %v1484 = vrot.slane %v1483, 2
        %v1485 = vadd.f32 %v1483, %v1484
        %v1486 = vrot.slane %v1485, 1
        %v1487 = vadd.f32 %v1485, %v1486
        %v1488 = vadd.f32 %v1384, %v1386
        %v1489 = vadd.f32 %v1488, %v1388
        %v1490 = vadd.f32 %v1489, %v1390
        %v1491 = vrot.slane %v1490, 4
        %v1492 = vadd.f32 %v1490, %v1491
        %v1493 = vrot.slane %v1492, 2
        %v1494 = vadd.f32 %v1492, %v1493
        %v1495 = vrot.slane %v1494, 1
        %v1496 = vadd.f32 %v1494, %v1495
        %v1497 = vadd.f32 %v1385, %v1387
        %v1498 = vadd.f32 %v1497, %v1389
        %v1499 = vadd.f32 %v1498, %v1391
        %v1500 = vrot.slane %v1499, 4
        %v1501 = vadd.f32 %v1499, %v1500
        %v1502 = vrot.slane %v1501, 2
        %v1503 = vadd.f32 %v1501, %v1502
        %v1504 = vrot.slane %v1503, 1
        %v1505 = vadd.f32 %v1503, %v1504
        %v1506 = vadd.f32 %v1392, %v1394
        %v1507 = vadd.f32 %v1506, %v1396
        %v1508 = vadd.f32 %v1507, %v1398
        %v1509 = vrot.slane %v1508, 4
        %v1510 = vadd.f32 %v1508, %v1509
        %v1511 = vrot.slane %v1510, 2
        %v1512 = vadd.f32 %v1510, %v1511
        %v1513 = vrot.slane %v1512, 1
        %v1514 = vadd.f32 %v1512, %v1513
        %v1515 = vadd.f32 %v1393, %v1395
        %v1516 = vadd.f32 %v1515, %v1397
        %v1517 = vadd.f32 %v1516, %v1399
        %v1518 = vrot.slane %v1517, 4
        %v1519 = vadd.f32 %v1517, %v1518
        %v1520 = vrot.slane %v1519, 2
        %v1521 = vadd.f32 %v1519, %v1520
        %v1522 = vrot.slane %v1521, 1
        %v1523 = vadd.f32 %v1521, %v1522
        %v1524 = vadd.f32 %v1400, %v1402
        %v1525 = vadd.f32 %v1524, %v1404
        %v1526 = vadd.f32 %v1525, %v1406
        %v1527 = vrot.slane %v1526, 4
        %v1528 = vadd.f32 %v1526, %v1527
        %v1529 = vrot.slane %v1528, 2
        %v1530 = vadd.f32 %v1528, %v1529
        %v1531 = vrot.slane %v1530, 1
        %v1532 = vadd.f32 %v1530, %v1531
        %v1533 = vadd.f32 %v1401, %v1403
        %v1534 = vadd.f32 %v1533, %v1405
        %v1535 = vadd.f32 %v1534, %v1407
        %v1536 = vrot.slane %v1535, 4
        %v1537 = vadd.f32 %v1535, %v1536
        %v1538 = vrot.slane %v1537, 2
        %v1539 = vadd.f32 %v1537, %v1538
        %v1540 = vrot.slane %v1539, 1
        %v1541 = vadd.f32 %v1539, %v1540
        %v1542 = vadd.f32 %v1408, %v1410
        %v1543 = vadd.f32 %v1542, %v1412
        %v1544 = vadd.f32 %v1543, %v1414
        %v1545 = vrot.slane %v1544, 4
        %v1546 = vadd.f32 %v1544, %v1545
        %v1547 = vrot.slane %v1546, 2
        %v1548 = vadd.f32 %v1546, %v1547
        %v1549 = vrot.slane %v1548, 1
        %v1550 = vadd.f32 %v1548, %v1549
        %v1551 = vadd.f32 %v1409, %v1411
        %v1552 = vadd.f32 %v1551, %v1413
        %v1553 = vadd.f32 %v1552, %v1415
        %v1554 = vrot.slane %v1553, 4
        %v1555 = vadd.f32 %v1553, %v1554
        %v1556 = vrot.slane %v1555, 2
        %v1557 = vadd.f32 %v1555, %v1556
        %v1558 = vrot.slane %v1557, 1
        %v1559 = vadd.f32 %v1557, %v1558
        %v1561 = vrot.slane %v1199, 1
        %v1562 = vrot.slane %v1199, 2
        %v1563 = vrot.slane %v1199, 3
        %v1564 = vrot.slane %v1199, 4
        %v1565 = vrot.slane %v1199, 5
        %v1566 = vrot.slane %v1199, 6
        %v1567 = vrot.slane %v1199, 7
        %v1576 = vmul.f32 %v802, %v1199
        %v1577 = vmul.f32 %v803, %v1199
        %v1578 = vmul.f32 %v804, %v1561
        %v1579 = vmul.f32 %v805, %v1561
        %v1580 = vmul.f32 %v806, %v1562
        %v1581 = vmul.f32 %v807, %v1562
        %v1582 = vmul.f32 %v808, %v1563
        %v1583 = vmul.f32 %v809, %v1563
        %v1584 = vmul.f32 %v810, %v1564
        %v1585 = vmul.f32 %v811, %v1564
        %v1586 = vmul.f32 %v812, %v1565
        %v1587 = vmul.f32 %v813, %v1565
        %v1588 = vmul.f32 %v814, %v1566
        %v1589 = vmul.f32 %v815, %v1566
        %v1590 = vmul.f32 %v816, %v1567
        %v1591 = vmul.f32 %v817, %v1567
        %v1592 = vsub.f32 %v1424, %v1576
        %v1593 = vsub.f32 %v1433, %v1577
        %v1594 = vsub.f32 %v1442, %v1578
        %v1595 = vsub.f32 %v1451, %v1579
        %v1596 = vsub.f32 %v1460, %v1580
        %v1597 = vsub.f32 %v1469, %v1581
        %v1598 = vsub.f32 %v1478, %v1582
        %v1599 = vsub.f32 %v1487, %v1583
        %v1600 = vsub.f32 %v1496, %v1584
        %v1601 = vsub.f32 %v1505, %v1585
        %v1602 = vsub.f32 %v1514, %v1586
        %v1603 = vsub.f32 %v1523, %v1587
        %v1604 = vsub.f32 %v1532, %v1588
        %v1605 = vsub.f32 %v1541, %v1589
        %v1606 = vsub.f32 %v1550, %v1590
        %v1607 = vsub.f32 %v1559, %v1591
        %v1608 = vmul.f32 %v898, %v1592
        %v1609 = vmul.f32 %v899, %v1593
        %v1610 = vmul.f32 %v900, %v1594
        %v1611 = vmul.f32 %v901, %v1595
        %v1612 = vmul.f32 %v902, %v1596
        %v1613 = vmul.f32 %v903, %v1597
        %v1614 = vmul.f32 %v904, %v1598
        %v1615 = vmul.f32 %v905, %v1599
        %v1616 = vmul.f32 %v906, %v1600
        %v1617 = vmul.f32 %v907, %v1601
        %v1618 = vmul.f32 %v908, %v1602
        %v1619 = vmul.f32 %v909, %v1603
        %v1620 = vmul.f32 %v910, %v1604
        %v1621 = vmul.f32 %v911, %v1605
        %v1622 = vmul.f32 %v912, %v1606
        %v1623 = vmul.f32 %v913, %v1607
        %v1640 = vrot.slane %v1610, 7
        %v1641 = vsel %vm1110, %v1640, %v1608
        %v1642 = vrot.slane %v1612, 6
        %v1643 = vsel %vm1112, %v1642, %v1641
        %v1644 = vrot.slane %v1614, 5
        %v1645 = vsel %vm1114, %v1644, %v1643
        %v1646 = vrot.slane %v1616, 4
        %v1647 = vsel %vm1116, %v1646, %v1645
        %v1648 = vrot.slane %v1618, 3
        %v1649 = vsel %vm1118, %v1648, %v1647
        %v1650 = vrot.slane %v1620, 2
        %v1651 = vsel %vm1120, %v1650, %v1649
        %v1652 = vrot.slane %v1622, 1
        %v1653 = vsel %vm1122, %v1652, %v1651
        %v1654 = vrot.slane %v1611, 7
        %v1655 = vsel %vm1110, %v1654, %v1609
        %v1656 = vrot.slane %v1613, 6
        %v1657 = vsel %vm1112, %v1656, %v1655
        %v1658 = vrot.slane %v1615, 5
        %v1659 = vsel %vm1114, %v1658, %v1657
        %v1660 = vrot.slane %v1617, 4
        %v1661 = vsel %vm1116, %v1660, %v1659
        %v1662 = vrot.slane %v1619, 3
        %v1663 = vsel %vm1118, %v1662, %v1661
        %v1664 = vrot.slane %v1621, 2
        %v1665 = vsel %vm1120, %v1664, %v1663
        %v1666 = vrot.slane %v1623, 1
        %v1667 = vsel %vm1122, %v1666, %v1665
        %v1670 = vmax.f32 %v1653, %v1667
        %1671 = vmax.xlane.f32.xlu0 %v1670
        %v1672 = vpop.xlane.xlu0 %1671
        %v1674 = vrot.slane %v1672, 1
        %v1675 = vrot.slane %v1672, 2
        %v1676 = vrot.slane %v1672, 3
        %v1677 = vrot.slane %v1672, 4
        %v1678 = vrot.slane %v1672, 5
        %v1679 = vrot.slane %v1672, 6
        %v1680 = vrot.slane %v1672, 7
        %v1689 = vsub.f32 %v1608, %v1672
        %v1690 = vsub.f32 %v1609, %v1672
        %v1691 = vsub.f32 %v1610, %v1674
        %v1692 = vsub.f32 %v1611, %v1674
        %v1693 = vsub.f32 %v1612, %v1675
        %v1694 = vsub.f32 %v1613, %v1675
        %v1695 = vsub.f32 %v1614, %v1676
        %v1696 = vsub.f32 %v1615, %v1676
        %v1697 = vsub.f32 %v1616, %v1677
        %v1698 = vsub.f32 %v1617, %v1677
        %v1699 = vsub.f32 %v1618, %v1678
        %v1700 = vsub.f32 %v1619, %v1678
        %v1701 = vsub.f32 %v1620, %v1679
        %v1702 = vsub.f32 %v1621, %v1679
        %v1703 = vsub.f32 %v1622, %v1680
        %v1704 = vsub.f32 %v1623, %v1680
        %v1705 = vmul.f32 %v1689, 1.442695
        %v1706 = vpow.pop %v1705
        %v1707 = vmul.f32 %v1690, 1.442695
        %v1708 = vpow.pop %v1707
        %v1709 = vmul.f32 %v1691, 1.442695
        %v1710 = vpow.pop %v1709
        %v1711 = vmul.f32 %v1692, 1.442695
        %v1712 = vpow.pop %v1711
        %v1713 = vmul.f32 %v1693, 1.442695
        %v1714 = vpow.pop %v1713
        %v1715 = vmul.f32 %v1694, 1.442695
        %v1716 = vpow.pop %v1715
        %v1717 = vmul.f32 %v1695, 1.442695
        %v1718 = vpow.pop %v1717
        %v1719 = vmul.f32 %v1696, 1.442695
        %v1720 = vpow.pop %v1719
        %v1721 = vmul.f32 %v1697, 1.442695
        %v1722 = vpow.pop %v1721
        %v1723 = vmul.f32 %v1698, 1.442695
        %v1724 = vpow.pop %v1723
        %v1725 = vmul.f32 %v1699, 1.442695
        %v1726 = vpow.pop %v1725
        %v1727 = vmul.f32 %v1700, 1.442695
        %v1728 = vpow.pop %v1727
        %v1729 = vmul.f32 %v1701, 1.442695
        %v1730 = vpow.pop %v1729
        %v1731 = vmul.f32 %v1702, 1.442695
        %v1732 = vpow.pop %v1731
        %v1733 = vmul.f32 %v1703, 1.442695
        %v1734 = vpow.pop %v1733
        %v1735 = vmul.f32 %v1704, 1.442695
        %v1736 = vpow.pop %v1735
        %v1753 = vrot.slane %v1710, 7
        %v1754 = vsel %vm1110, %v1753, %v1706
        %v1755 = vrot.slane %v1714, 6
        %v1756 = vsel %vm1112, %v1755, %v1754
        %v1757 = vrot.slane %v1718, 5
        %v1758 = vsel %vm1114, %v1757, %v1756
        %v1759 = vrot.slane %v1722, 4
        %v1760 = vsel %vm1116, %v1759, %v1758
        %v1761 = vrot.slane %v1726, 3
        %v1762 = vsel %vm1118, %v1761, %v1760
        %v1763 = vrot.slane %v1730, 2
        %v1764 = vsel %vm1120, %v1763, %v1762
        %v1765 = vrot.slane %v1734, 1
        %v1766 = vsel %vm1122, %v1765, %v1764
        %v1767 = vrot.slane %v1712, 7
        %v1768 = vsel %vm1110, %v1767, %v1708
        %v1769 = vrot.slane %v1716, 6
        %v1770 = vsel %vm1112, %v1769, %v1768
        %v1771 = vrot.slane %v1720, 5
        %v1772 = vsel %vm1114, %v1771, %v1770
        %v1773 = vrot.slane %v1724, 4
        %v1774 = vsel %vm1116, %v1773, %v1772
        %v1775 = vrot.slane %v1728, 3
        %v1776 = vsel %vm1118, %v1775, %v1774
        %v1777 = vrot.slane %v1732, 2
        %v1778 = vsel %vm1120, %v1777, %v1776
        %v1779 = vrot.slane %v1736, 1
        %v1780 = vsel %vm1122, %v1779, %v1778
        %v1783 = vadd.f32 %v1766, %v1780
        %1784 = vadd.xlane.f32.xlu0 %v1783
        %v1785 = vpop.xlane.xlu0 %1784
        %v1786 = vrcp.pop %v1785
        %v1788 = vrot.slane %v1786, 1
        %v1789 = vrot.slane %v1786, 2
        %v1790 = vrot.slane %v1786, 3
        %v1791 = vrot.slane %v1786, 4
        %v1792 = vrot.slane %v1786, 5
        %v1793 = vrot.slane %v1786, 6
        %v1794 = vrot.slane %v1786, 7
        %v1803 = vmul.f32 %v1706, %v1786
        %v1804 = vmul.f32 %v1708, %v1786
        %v1805 = vmul.f32 %v1710, %v1788
        %v1806 = vmul.f32 %v1712, %v1788
        %v1807 = vmul.f32 %v1714, %v1789
        %v1808 = vmul.f32 %v1716, %v1789
        %v1809 = vmul.f32 %v1718, %v1790
        %v1810 = vmul.f32 %v1720, %v1790
        %v1811 = vmul.f32 %v1722, %v1791
        %v1812 = vmul.f32 %v1724, %v1791
        %v1813 = vmul.f32 %v1726, %v1792
        %v1814 = vmul.f32 %v1728, %v1792
        %v1815 = vmul.f32 %v1730, %v1793
        %v1816 = vmul.f32 %v1732, %v1793
        %v1817 = vmul.f32 %v1734, %v1794
        %v1818 = vmul.f32 %v1736, %v1794
        %v1819 = vmul.f32 %v1785, %v1786
        %v1820 = vmul.f32 %v1803, %v898
        %v1821 = vmul.f32 %v1804, %v899
        %v1822 = vmul.f32 %v1805, %v900
        %v1823 = vmul.f32 %v1806, %v901
        %v1824 = vmul.f32 %v1807, %v902
        %v1825 = vmul.f32 %v1808, %v903
        %v1826 = vmul.f32 %v1809, %v904
        %v1827 = vmul.f32 %v1810, %v905
        %v1828 = vmul.f32 %v1811, %v906
        %v1829 = vmul.f32 %v1812, %v907
        %v1830 = vmul.f32 %v1813, %v908
        %v1831 = vmul.f32 %v1814, %v909
        %v1832 = vmul.f32 %v1815, %v910
        %v1833 = vmul.f32 %v1816, %v911
        %v1834 = vmul.f32 %v1817, %v912
        %v1835 = vmul.f32 %v1818, %v913
        %v1836 = vlaneseq
        %v1837 = vshrl.u32 %v1836, 7
        %v1838 = vsub.s32 0, %v1837
        %v1839 = vrot.slane %v1820, %v1838
        %v1840 = vlaneseq
        %v1841 = vshrl.u32 %v1840, 7
        %v1842 = vsub.s32 0, %v1841
        %v1843 = vrot.slane %v1821, %v1842
        %v1844 = vlaneseq
        %v1845 = vshrl.u32 %v1844, 7
        %v1846 = vsub.s32 0, %v1845
        %v1847 = vrot.slane %v1822, %v1846
        %v1848 = vlaneseq
        %v1849 = vshrl.u32 %v1848, 7
        %v1850 = vsub.s32 0, %v1849
        %v1851 = vrot.slane %v1823, %v1850
        %v1852 = vlaneseq
        %v1853 = vshrl.u32 %v1852, 7
        %v1854 = vsub.s32 0, %v1853
        %v1855 = vrot.slane %v1824, %v1854
        %v1856 = vlaneseq
        %v1857 = vshrl.u32 %v1856, 7
        %v1858 = vsub.s32 0, %v1857
        %v1859 = vrot.slane %v1825, %v1858
        %v1860 = vlaneseq
        %v1861 = vshrl.u32 %v1860, 7
        %v1862 = vsub.s32 0, %v1861
        %v1863 = vrot.slane %v1826, %v1862
        %v1864 = vlaneseq
        %v1865 = vshrl.u32 %v1864, 7
        %v1866 = vsub.s32 0, %v1865
        %v1867 = vrot.slane %v1827, %v1866
        %v1868 = vlaneseq
        %v1869 = vshrl.u32 %v1868, 7
        %v1870 = vsub.s32 0, %v1869
        %v1871 = vrot.slane %v1828, %v1870
        %v1872 = vlaneseq
        %v1873 = vshrl.u32 %v1872, 7
        %v1874 = vsub.s32 0, %v1873
        %v1875 = vrot.slane %v1829, %v1874
        %v1876 = vlaneseq
        %v1877 = vshrl.u32 %v1876, 7
        %v1878 = vsub.s32 0, %v1877
        %v1879 = vrot.slane %v1830, %v1878
        %v1880 = vlaneseq
        %v1881 = vshrl.u32 %v1880, 7
        %v1882 = vsub.s32 0, %v1881
        %v1883 = vrot.slane %v1831, %v1882
        %v1884 = vlaneseq
        %v1885 = vshrl.u32 %v1884, 7
        %v1886 = vsub.s32 0, %v1885
        %v1887 = vrot.slane %v1832, %v1886
        %v1888 = vlaneseq
        %v1889 = vshrl.u32 %v1888, 7
        %v1890 = vsub.s32 0, %v1889
        %v1891 = vrot.slane %v1833, %v1890
        %v1892 = vlaneseq
        %v1893 = vshrl.u32 %v1892, 7
        %v1894 = vsub.s32 0, %v1893
        %v1895 = vrot.slane %v1834, %v1894
        %v1896 = vlaneseq
        %v1897 = vshrl.u32 %v1896, 7
        %v1898 = vsub.s32 0, %v1897
        %v1899 = vrot.slane %v1835, %v1898
        %v1900 = vmul.f32 %v1839, %v258
        %v1901 = vmul.f32 %v1843, %v259
        %v1902 = vmul.f32 %v1839, %v260
        %v1903 = vmul.f32 %v1843, %v261
        %v1904 = vmul.f32 %v1839, %v262
        %v1905 = vmul.f32 %v1843, %v263
        %v1906 = vmul.f32 %v1839, %v264
        %v1907 = vmul.f32 %v1843, %v265
        %v1908 = vmul.f32 %v1847, %v266
        %v1909 = vmul.f32 %v1851, %v267
        %v1910 = vmul.f32 %v1847, %v268
        %v1911 = vmul.f32 %v1851, %v269
        %v1912 = vmul.f32 %v1847, %v270
        %v1913 = vmul.f32 %v1851, %v271
        %v1914 = vmul.f32 %v1847, %v272
        %v1915 = vmul.f32 %v1851, %v273
        %v1916 = vmul.f32 %v1855, %v274
        %v1917 = vmul.f32 %v1859, %v275
        %v1918 = vmul.f32 %v1855, %v276
        %v1919 = vmul.f32 %v1859, %v277
        %v1920 = vmul.f32 %v1855, %v278
        %v1921 = vmul.f32 %v1859, %v279
        %v1922 = vmul.f32 %v1855, %v280
        %v1923 = vmul.f32 %v1859, %v281
        %v1924 = vmul.f32 %v1863, %v282
        %v1925 = vmul.f32 %v1867, %v283
        %v1926 = vmul.f32 %v1863, %v284
        %v1927 = vmul.f32 %v1867, %v285
        %v1928 = vmul.f32 %v1863, %v286
        %v1929 = vmul.f32 %v1867, %v287
        %v1930 = vmul.f32 %v1863, %v288
        %v1931 = vmul.f32 %v1867, %v289
        %v1932 = vmul.f32 %v1871, %v290
        %v1933 = vmul.f32 %v1875, %v291
        %v1934 = vmul.f32 %v1871, %v292
        %v1935 = vmul.f32 %v1875, %v293
        %v1936 = vmul.f32 %v1871, %v294
        %v1937 = vmul.f32 %v1875, %v295
        %v1938 = vmul.f32 %v1871, %v296
        %v1939 = vmul.f32 %v1875, %v297
        %v1940 = vmul.f32 %v1879, %v298
        %v1941 = vmul.f32 %v1883, %v299
        %v1942 = vmul.f32 %v1879, %v300
        %v1943 = vmul.f32 %v1883, %v301
        %v1944 = vmul.f32 %v1879, %v302
        %v1945 = vmul.f32 %v1883, %v303
        %v1946 = vmul.f32 %v1879, %v304
        %v1947 = vmul.f32 %v1883, %v305
        %v1948 = vmul.f32 %v1887, %v306
        %v1949 = vmul.f32 %v1891, %v307
        %v1950 = vmul.f32 %v1887, %v308
        %v1951 = vmul.f32 %v1891, %v309
        %v1952 = vmul.f32 %v1887, %v310
        %v1953 = vmul.f32 %v1891, %v311
        %v1954 = vmul.f32 %v1887, %v312
        %v1955 = vmul.f32 %v1891, %v313
        %v1956 = vmul.f32 %v1895, %v314
        %v1957 = vmul.f32 %v1899, %v315
        %v1958 = vmul.f32 %v1895, %v316
        %v1959 = vmul.f32 %v1899, %v317
        %v1960 = vmul.f32 %v1895, %v318
        %v1961 = vmul.f32 %v1899, %v319
        %v1962 = vmul.f32 %v1895, %v320
        %v1963 = vmul.f32 %v1899, %v321
        %v1964 = vadd.f32 %v1900, %v1901
        %1965 = vadd.xlane.f32.xlu0 %v1964
        %v1966 = vpop.xlane.xlu0 %1965
        %v1967 = vadd.f32 %v1902, %v1903
        %1968 = vadd.xlane.f32.xlu0 %v1967
        %v1969 = vpop.xlane.xlu0 %1968
        %v1970 = vadd.f32 %v1904, %v1905
        %1971 = vadd.xlane.f32.xlu0 %v1970
        %v1972 = vpop.xlane.xlu0 %1971
        %v1973 = vadd.f32 %v1906, %v1907
        %1974 = vadd.xlane.f32.xlu0 %v1973
        %v1975 = vpop.xlane.xlu0 %1974
        %v1976 = vadd.f32 %v1908, %v1909
        %1977 = vadd.xlane.f32.xlu0 %v1976
        %v1978 = vpop.xlane.xlu0 %1977
        %v1979 = vadd.f32 %v1910, %v1911
        %1980 = vadd.xlane.f32.xlu0 %v1979
        %v1981 = vpop.xlane.xlu0 %1980
        %v1982 = vadd.f32 %v1912, %v1913
        %1983 = vadd.xlane.f32.xlu0 %v1982
        %v1984 = vpop.xlane.xlu0 %1983
        %v1985 = vadd.f32 %v1914, %v1915
        %1986 = vadd.xlane.f32.xlu0 %v1985
        %v1987 = vpop.xlane.xlu0 %1986
        %v1988 = vadd.f32 %v1916, %v1917
        %1989 = vadd.xlane.f32.xlu0 %v1988
        %v1990 = vpop.xlane.xlu0 %1989
        %v1991 = vadd.f32 %v1918, %v1919
        %1992 = vadd.xlane.f32.xlu0 %v1991
        %v1993 = vpop.xlane.xlu0 %1992
        %v1994 = vadd.f32 %v1920, %v1921
        %1995 = vadd.xlane.f32.xlu0 %v1994
        %v1996 = vpop.xlane.xlu0 %1995
        %v1997 = vadd.f32 %v1922, %v1923
        %1998 = vadd.xlane.f32.xlu0 %v1997
        %v1999 = vpop.xlane.xlu0 %1998
        %v2000 = vadd.f32 %v1924, %v1925
        %2001 = vadd.xlane.f32.xlu0 %v2000
        %v2002 = vpop.xlane.xlu0 %2001
        %v2003 = vadd.f32 %v1926, %v1927
        %2004 = vadd.xlane.f32.xlu0 %v2003
        %v2005 = vpop.xlane.xlu0 %2004
        %v2006 = vadd.f32 %v1928, %v1929
        %2007 = vadd.xlane.f32.xlu0 %v2006
        %v2008 = vpop.xlane.xlu0 %2007
        %v2009 = vadd.f32 %v1930, %v1931
        %2010 = vadd.xlane.f32.xlu0 %v2009
        %v2011 = vpop.xlane.xlu0 %2010
        %v2012 = vadd.f32 %v1932, %v1933
        %2013 = vadd.xlane.f32.xlu0 %v2012
        %v2014 = vpop.xlane.xlu0 %2013
        %v2015 = vadd.f32 %v1934, %v1935
        %2016 = vadd.xlane.f32.xlu0 %v2015
        %v2017 = vpop.xlane.xlu0 %2016
        %v2018 = vadd.f32 %v1936, %v1937
        %2019 = vadd.xlane.f32.xlu0 %v2018
        %v2020 = vpop.xlane.xlu0 %2019
        %v2021 = vadd.f32 %v1938, %v1939
        %2022 = vadd.xlane.f32.xlu0 %v2021
        %v2023 = vpop.xlane.xlu0 %2022
        %v2024 = vadd.f32 %v1940, %v1941
        %2025 = vadd.xlane.f32.xlu0 %v2024
        %v2026 = vpop.xlane.xlu0 %2025
        %v2027 = vadd.f32 %v1942, %v1943
        %2028 = vadd.xlane.f32.xlu0 %v2027
        %v2029 = vpop.xlane.xlu0 %2028
        %v2030 = vadd.f32 %v1944, %v1945
        %2031 = vadd.xlane.f32.xlu0 %v2030
        %v2032 = vpop.xlane.xlu0 %2031
        %v2033 = vadd.f32 %v1946, %v1947
        %2034 = vadd.xlane.f32.xlu0 %v2033
        %v2035 = vpop.xlane.xlu0 %2034
        %v2036 = vadd.f32 %v1948, %v1949
        %2037 = vadd.xlane.f32.xlu0 %v2036
        %v2038 = vpop.xlane.xlu0 %2037
        %v2039 = vadd.f32 %v1950, %v1951
        %2040 = vadd.xlane.f32.xlu0 %v2039
        %v2041 = vpop.xlane.xlu0 %2040
        %v2042 = vadd.f32 %v1952, %v1953
        %2043 = vadd.xlane.f32.xlu0 %v2042
        %v2044 = vpop.xlane.xlu0 %2043
        %v2045 = vadd.f32 %v1954, %v1955
        %2046 = vadd.xlane.f32.xlu0 %v2045
        %v2047 = vpop.xlane.xlu0 %2046
        %v2048 = vadd.f32 %v1956, %v1957
        %2049 = vadd.xlane.f32.xlu0 %v2048
        %v2050 = vpop.xlane.xlu0 %2049
        %v2051 = vadd.f32 %v1958, %v1959
        %2052 = vadd.xlane.f32.xlu0 %v2051
        %v2053 = vpop.xlane.xlu0 %2052
        %v2054 = vadd.f32 %v1960, %v1961
        %2055 = vadd.xlane.f32.xlu0 %v2054
        %v2056 = vpop.xlane.xlu0 %2055
        %v2057 = vadd.f32 %v1962, %v1963
        %2058 = vadd.xlane.f32.xlu0 %v2057
        %v2059 = vpop.xlane.xlu0 %2058
        %v2060 = vmul.f32 %v1820, %v802
        %v2061 = vmul.f32 %v1821, %v803
        %v2062 = vmul.f32 %v1822, %v804
        %v2063 = vmul.f32 %v1823, %v805
        %v2064 = vmul.f32 %v1824, %v806
        %v2065 = vmul.f32 %v1825, %v807
        %v2066 = vmul.f32 %v1826, %v808
        %v2067 = vmul.f32 %v1827, %v809
        %v2068 = vmul.f32 %v1828, %v810
        %v2069 = vmul.f32 %v1829, %v811
        %v2070 = vmul.f32 %v1830, %v812
        %v2071 = vmul.f32 %v1831, %v813
        %v2072 = vmul.f32 %v1832, %v814
        %v2073 = vmul.f32 %v1833, %v815
        %v2074 = vmul.f32 %v1834, %v816
        %v2075 = vmul.f32 %v1835, %v817
        %v2092 = vrot.slane %v2062, 7
        %v2093 = vsel %vm1110, %v2092, %v2060
        %v2094 = vrot.slane %v2064, 6
        %v2095 = vsel %vm1112, %v2094, %v2093
        %v2096 = vrot.slane %v2066, 5
        %v2097 = vsel %vm1114, %v2096, %v2095
        %v2098 = vrot.slane %v2068, 4
        %v2099 = vsel %vm1116, %v2098, %v2097
        %v2100 = vrot.slane %v2070, 3
        %v2101 = vsel %vm1118, %v2100, %v2099
        %v2102 = vrot.slane %v2072, 2
        %v2103 = vsel %vm1120, %v2102, %v2101
        %v2104 = vrot.slane %v2074, 1
        %v2105 = vsel %vm1122, %v2104, %v2103
        %v2106 = vrot.slane %v2063, 7
        %v2107 = vsel %vm1110, %v2106, %v2061
        %v2108 = vrot.slane %v2065, 6
        %v2109 = vsel %vm1112, %v2108, %v2107
        %v2110 = vrot.slane %v2067, 5
        %v2111 = vsel %vm1114, %v2110, %v2109
        %v2112 = vrot.slane %v2069, 4
        %v2113 = vsel %vm1116, %v2112, %v2111
        %v2114 = vrot.slane %v2071, 3
        %v2115 = vsel %vm1118, %v2114, %v2113
        %v2116 = vrot.slane %v2073, 2
        %v2117 = vsel %vm1120, %v2116, %v2115
        %v2118 = vrot.slane %v2075, 1
        %v2119 = vsel %vm1122, %v2118, %v2117
        %v2122 = vadd.f32 %v2105, %v2119
        %2123 = vadd.xlane.f32.xlu0 %v2122
        %v2124 = vpop.xlane.xlu0 %2123
        %v2125 = vld [vmem:[#allocation5] sm:$0x1]
        %v2127 = vlaneseq
        %v2128 = vshrl.u32 %v2127, 7
        %v2129 = vsub.s32 0, %v2128
        %v2130 = vrot.slane %v2124, %v2129
        %v2131 = vlaneseq
        %v2132 = vshrl.u32 %v2131, 7
        %v2133 = vsub.s32 1, %v2132
        %v2134 = vrot.slane %v2124, %v2133
        %v2135 = vlaneseq
        %v2136 = vshrl.u32 %v2135, 7
        %v2137 = vsub.s32 2, %v2136
        %v2138 = vrot.slane %v2124, %v2137
        %v2139 = vlaneseq
        %v2140 = vshrl.u32 %v2139, 7
        %v2141 = vsub.s32 3, %v2140
        %v2142 = vrot.slane %v2124, %v2141
        %v2143 = vlaneseq
        %v2144 = vshrl.u32 %v2143, 7
        %v2145 = vsub.s32 4, %v2144
        %v2146 = vrot.slane %v2124, %v2145
        %v2147 = vlaneseq
        %v2148 = vshrl.u32 %v2147, 7
        %v2149 = vsub.s32 5, %v2148
        %v2150 = vrot.slane %v2124, %v2149
        %v2151 = vlaneseq
        %v2152 = vshrl.u32 %v2151, 7
        %v2153 = vsub.s32 6, %v2152
        %v2154 = vrot.slane %v2124, %v2153
        %v2155 = vlaneseq
        %v2156 = vshrl.u32 %v2155, 7
        %v2157 = vsub.s32 7, %v2156
        %v2158 = vrot.slane %v2124, %v2157
        %v2167 = vsub.f32 %v1966, %v2130
        %v2168 = vsub.f32 %v1969, %v2130
        %v2169 = vsub.f32 %v1972, %v2130
        %v2170 = vsub.f32 %v1975, %v2130
        %v2171 = vsub.f32 %v1978, %v2134
        %v2172 = vsub.f32 %v1981, %v2134
        %v2173 = vsub.f32 %v1984, %v2134
        %v2174 = vsub.f32 %v1987, %v2134
        %v2175 = vsub.f32 %v1990, %v2138
        %v2176 = vsub.f32 %v1993, %v2138
        %v2177 = vsub.f32 %v1996, %v2138
        %v2178 = vsub.f32 %v1999, %v2138
        %v2179 = vsub.f32 %v2002, %v2142
        %v2180 = vsub.f32 %v2005, %v2142
        %v2181 = vsub.f32 %v2008, %v2142
        %v2182 = vsub.f32 %v2011, %v2142
        %v2183 = vsub.f32 %v2014, %v2146
        %v2184 = vsub.f32 %v2017, %v2146
        %v2185 = vsub.f32 %v2020, %v2146
        %v2186 = vsub.f32 %v2023, %v2146
        %v2187 = vsub.f32 %v2026, %v2150
        %v2188 = vsub.f32 %v2029, %v2150
        %v2189 = vsub.f32 %v2032, %v2150
        %v2190 = vsub.f32 %v2035, %v2150
        %v2191 = vsub.f32 %v2038, %v2154
        %v2192 = vsub.f32 %v2041, %v2154
        %v2193 = vsub.f32 %v2044, %v2154
        %v2194 = vsub.f32 %v2047, %v2154
        %v2195 = vsub.f32 %v2050, %v2158
        %v2196 = vsub.f32 %v2053, %v2158
        %v2197 = vsub.f32 %v2056, %v2158
        %v2198 = vsub.f32 %v2059, %v2158
        %v2200 = vlaneseq
        %v2201 = vshrl.u32 %v2200, 7
        %v2202 = vsub.s32 0, %v2201
        %v2203 = vrot.slane %v2125, %v2202
        %2237 = vset.pattern.permute.xlu0 0
        %2238 = vperm.xlu0 %2237, %v2167
        %v2239 = vpop.permute.xlu0 %2238
        %2240 = vset.pattern.permute.xlu0 0
        %2241 = vperm.xlu0 %2240, %v2168
        %v2242 = vpop.permute.xlu0 %2241
        %2243 = vset.pattern.permute.xlu0 0
        %2244 = vperm.xlu0 %2243, %v2169
        %v2245 = vpop.permute.xlu0 %2244
        %2246 = vset.pattern.permute.xlu0 0
        %2247 = vperm.xlu0 %2246, %v2170
        %v2248 = vpop.permute.xlu0 %2247
        %2249 = vset.pattern.permute.xlu0 0
        %2250 = vperm.xlu0 %2249, %v2171
        %v2251 = vpop.permute.xlu0 %2250
        %2252 = vset.pattern.permute.xlu0 0
        %2253 = vperm.xlu0 %2252, %v2172
        %v2254 = vpop.permute.xlu0 %2253
        %2255 = vset.pattern.permute.xlu0 0
        %2256 = vperm.xlu0 %2255, %v2173
        %v2257 = vpop.permute.xlu0 %2256
        %2258 = vset.pattern.permute.xlu0 0
        %2259 = vperm.xlu0 %2258, %v2174
        %v2260 = vpop.permute.xlu0 %2259
        %2261 = vset.pattern.permute.xlu0 0
        %2262 = vperm.xlu0 %2261, %v2175
        %v2263 = vpop.permute.xlu0 %2262
        %2264 = vset.pattern.permute.xlu0 0
        %2265 = vperm.xlu0 %2264, %v2176
        %v2266 = vpop.permute.xlu0 %2265
        %2267 = vset.pattern.permute.xlu0 0
        %2268 = vperm.xlu0 %2267, %v2177
        %v2269 = vpop.permute.xlu0 %2268
        %2270 = vset.pattern.permute.xlu0 0
        %2271 = vperm.xlu0 %2270, %v2178
        %v2272 = vpop.permute.xlu0 %2271
        %2273 = vset.pattern.permute.xlu0 0
        %2274 = vperm.xlu0 %2273, %v2179
        %v2275 = vpop.permute.xlu0 %2274
        %2276 = vset.pattern.permute.xlu0 0
        %2277 = vperm.xlu0 %2276, %v2180
        %v2278 = vpop.permute.xlu0 %2277
        %2279 = vset.pattern.permute.xlu0 0
        %2280 = vperm.xlu0 %2279, %v2181
        %v2281 = vpop.permute.xlu0 %2280
        %2282 = vset.pattern.permute.xlu0 0
        %2283 = vperm.xlu0 %2282, %v2182
        %v2284 = vpop.permute.xlu0 %2283
        %2285 = vset.pattern.permute.xlu0 0
        %2286 = vperm.xlu0 %2285, %v2183
        %v2287 = vpop.permute.xlu0 %2286
        %2288 = vset.pattern.permute.xlu0 0
        %2289 = vperm.xlu0 %2288, %v2184
        %v2290 = vpop.permute.xlu0 %2289
        %2291 = vset.pattern.permute.xlu0 0
        %2292 = vperm.xlu0 %2291, %v2185
        %v2293 = vpop.permute.xlu0 %2292
        %2294 = vset.pattern.permute.xlu0 0
        %2295 = vperm.xlu0 %2294, %v2186
        %v2296 = vpop.permute.xlu0 %2295
        %2297 = vset.pattern.permute.xlu0 0
        %2298 = vperm.xlu0 %2297, %v2187
        %v2299 = vpop.permute.xlu0 %2298
        %2300 = vset.pattern.permute.xlu0 0
        %2301 = vperm.xlu0 %2300, %v2188
        %v2302 = vpop.permute.xlu0 %2301
        %2303 = vset.pattern.permute.xlu0 0
        %2304 = vperm.xlu0 %2303, %v2189
        %v2305 = vpop.permute.xlu0 %2304
        %2306 = vset.pattern.permute.xlu0 0
        %2307 = vperm.xlu0 %2306, %v2190
        %v2308 = vpop.permute.xlu0 %2307
        %2309 = vset.pattern.permute.xlu0 0
        %2310 = vperm.xlu0 %2309, %v2191
        %v2311 = vpop.permute.xlu0 %2310
        %2312 = vset.pattern.permute.xlu0 0
        %2313 = vperm.xlu0 %2312, %v2192
        %v2314 = vpop.permute.xlu0 %2313
        %2315 = vset.pattern.permute.xlu0 0
        %2316 = vperm.xlu0 %2315, %v2193
        %v2317 = vpop.permute.xlu0 %2316
        %2318 = vset.pattern.permute.xlu0 0
        %2319 = vperm.xlu0 %2318, %v2194
        %v2320 = vpop.permute.xlu0 %2319
        %2321 = vset.pattern.permute.xlu0 0
        %2322 = vperm.xlu0 %2321, %v2195
        %v2323 = vpop.permute.xlu0 %2322
        %2324 = vset.pattern.permute.xlu0 0
        %2325 = vperm.xlu0 %2324, %v2196
        %v2326 = vpop.permute.xlu0 %2325
        %2327 = vset.pattern.permute.xlu0 0
        %2328 = vperm.xlu0 %2327, %v2197
        %v2329 = vpop.permute.xlu0 %2328
        %2330 = vset.pattern.permute.xlu0 0
        %2331 = vperm.xlu0 %2330, %v2198
        %v2332 = vpop.permute.xlu0 %2331
        %v2333 = vlaneseq
        %v2334 = vshrl.u32 %v2333, 7
        %v2335 = vsub.s32 %v951, %v2334
        %v2336 = vrot.slane %v2239, %v2335
        %v2337 = vlaneseq
        %v2338 = vshrl.u32 %v2337, 7
        %v2339 = vsub.s32 %v956, %v2338
        %v2340 = vrot.slane %v2242, %v2339
        %v2341 = vsel %vm961, %v2340, %v2336
        %v2342 = vlaneseq
        %v2343 = vshrl.u32 %v2342, 7
        %v2344 = vsub.s32 %v963, %v2343
        %v2345 = vrot.slane %v2245, %v2344
        %v2346 = vsel %vm968, %v2345, %v2341
        %v2347 = vlaneseq
        %v2348 = vshrl.u32 %v2347, 7
        %v2349 = vsub.s32 %v970, %v2348
        %v2350 = vrot.slane %v2248, %v2349
        %v2351 = vsel %vm975, %v2350, %v2346
        %v2352 = vlaneseq
        %v2353 = vshrl.u32 %v2352, 7
        %v2354 = vsub.s32 %v951, %v2353
        %v2355 = vrot.slane %v2251, %v2354
        %v2356 = vlaneseq
        %v2357 = vshrl.u32 %v2356, 7
        %v2358 = vsub.s32 %v956, %v2357
        %v2359 = vrot.slane %v2254, %v2358
        %v2360 = vsel %vm961, %v2359, %v2355
        %v2361 = vlaneseq
        %v2362 = vshrl.u32 %v2361, 7
        %v2363 = vsub.s32 %v963, %v2362
        %v2364 = vrot.slane %v2257, %v2363
        %v2365 = vsel %vm968, %v2364, %v2360
        %v2366 = vlaneseq
        %v2367 = vshrl.u32 %v2366, 7
        %v2368 = vsub.s32 %v970, %v2367
        %v2369 = vrot.slane %v2260, %v2368
        %v2370 = vsel %vm975, %v2369, %v2365
        %v2371 = vlaneseq
        %v2372 = vshrl.u32 %v2371, 7
        %v2373 = vsub.s32 %v951, %v2372
        %v2374 = vrot.slane %v2263, %v2373
        %v2375 = vlaneseq
        %v2376 = vshrl.u32 %v2375, 7
        %v2377 = vsub.s32 %v956, %v2376
        %v2378 = vrot.slane %v2266, %v2377
        %v2379 = vsel %vm961, %v2378, %v2374
        %v2380 = vlaneseq
        %v2381 = vshrl.u32 %v2380, 7
        %v2382 = vsub.s32 %v963, %v2381
        %v2383 = vrot.slane %v2269, %v2382
        %v2384 = vsel %vm968, %v2383, %v2379
        %v2385 = vlaneseq
        %v2386 = vshrl.u32 %v2385, 7
        %v2387 = vsub.s32 %v970, %v2386
        %v2388 = vrot.slane %v2272, %v2387
        %v2389 = vsel %vm975, %v2388, %v2384
        %v2390 = vlaneseq
        %v2391 = vshrl.u32 %v2390, 7
        %v2392 = vsub.s32 %v951, %v2391
        %v2393 = vrot.slane %v2275, %v2392
        %v2394 = vlaneseq
        %v2395 = vshrl.u32 %v2394, 7
        %v2396 = vsub.s32 %v956, %v2395
        %v2397 = vrot.slane %v2278, %v2396
        %v2398 = vsel %vm961, %v2397, %v2393
        %v2399 = vlaneseq
        %v2400 = vshrl.u32 %v2399, 7
        %v2401 = vsub.s32 %v963, %v2400
        %v2402 = vrot.slane %v2281, %v2401
        %v2403 = vsel %vm968, %v2402, %v2398
        %v2404 = vlaneseq
        %v2405 = vshrl.u32 %v2404, 7
        %v2406 = vsub.s32 %v970, %v2405
        %v2407 = vrot.slane %v2284, %v2406
        %v2408 = vsel %vm975, %v2407, %v2403
        %v2409 = vlaneseq
        %v2410 = vshrl.u32 %v2409, 7
        %v2411 = vsub.s32 %v951, %v2410
        %v2412 = vrot.slane %v2287, %v2411
        %v2413 = vlaneseq
        %v2414 = vshrl.u32 %v2413, 7
        %v2415 = vsub.s32 %v956, %v2414
        %v2416 = vrot.slane %v2290, %v2415
        %v2417 = vsel %vm961, %v2416, %v2412
        %v2418 = vlaneseq
        %v2419 = vshrl.u32 %v2418, 7
        %v2420 = vsub.s32 %v963, %v2419
        %v2421 = vrot.slane %v2293, %v2420
        %v2422 = vsel %vm968, %v2421, %v2417
        %v2423 = vlaneseq
        %v2424 = vshrl.u32 %v2423, 7
        %v2425 = vsub.s32 %v970, %v2424
        %v2426 = vrot.slane %v2296, %v2425
        %v2427 = vsel %vm975, %v2426, %v2422
        %v2428 = vlaneseq
        %v2429 = vshrl.u32 %v2428, 7
        %v2430 = vsub.s32 %v951, %v2429
        %v2431 = vrot.slane %v2299, %v2430
        %v2432 = vlaneseq
        %v2433 = vshrl.u32 %v2432, 7
        %v2434 = vsub.s32 %v956, %v2433
        %v2435 = vrot.slane %v2302, %v2434
        %v2436 = vsel %vm961, %v2435, %v2431
        %v2437 = vlaneseq
        %v2438 = vshrl.u32 %v2437, 7
        %v2439 = vsub.s32 %v963, %v2438
        %v2440 = vrot.slane %v2305, %v2439
        %v2441 = vsel %vm968, %v2440, %v2436
        %v2442 = vlaneseq
        %v2443 = vshrl.u32 %v2442, 7
        %v2444 = vsub.s32 %v970, %v2443
        %v2445 = vrot.slane %v2308, %v2444
        %v2446 = vsel %vm975, %v2445, %v2441
        %v2447 = vlaneseq
        %v2448 = vshrl.u32 %v2447, 7
        %v2449 = vsub.s32 %v951, %v2448
        %v2450 = vrot.slane %v2311, %v2449
        %v2451 = vlaneseq
        %v2452 = vshrl.u32 %v2451, 7
        %v2453 = vsub.s32 %v956, %v2452
        %v2454 = vrot.slane %v2314, %v2453
        %v2455 = vsel %vm961, %v2454, %v2450
        %v2456 = vlaneseq
        %v2457 = vshrl.u32 %v2456, 7
        %v2458 = vsub.s32 %v963, %v2457
        %v2459 = vrot.slane %v2317, %v2458
        %v2460 = vsel %vm968, %v2459, %v2455
        %v2461 = vlaneseq
        %v2462 = vshrl.u32 %v2461, 7
        %v2463 = vsub.s32 %v970, %v2462
        %v2464 = vrot.slane %v2320, %v2463
        %v2465 = vsel %vm975, %v2464, %v2460
        %v2466 = vlaneseq
        %v2467 = vshrl.u32 %v2466, 7
        %v2468 = vsub.s32 %v951, %v2467
        %v2469 = vrot.slane %v2323, %v2468
        %v2470 = vlaneseq
        %v2471 = vshrl.u32 %v2470, 7
        %v2472 = vsub.s32 %v956, %v2471
        %v2473 = vrot.slane %v2326, %v2472
        %v2474 = vsel %vm961, %v2473, %v2469
        %v2475 = vlaneseq
        %v2476 = vshrl.u32 %v2475, 7
        %v2477 = vsub.s32 %v963, %v2476
        %v2478 = vrot.slane %v2329, %v2477
        %v2479 = vsel %vm968, %v2478, %v2474
        %v2480 = vlaneseq
        %v2481 = vshrl.u32 %v2480, 7
        %v2482 = vsub.s32 %v970, %v2481
        %v2483 = vrot.slane %v2332, %v2482
        %v2484 = vsel %vm975, %v2483, %v2479
        %v2485 = vsel %vm1110, %v2370, %v2351
        %v2486 = vsel %vm1112, %v2389, %v2485
        %v2487 = vsel %vm1114, %v2408, %v2486
        %v2488 = vsel %vm1116, %v2427, %v2487
        %v2489 = vsel %vm1118, %v2446, %v2488
        %v2490 = vsel %vm1120, %v2465, %v2489
        %v2491 = vsel %vm1122, %v2484, %v2490
        %v2493 = vmul.f32 %v2203, %v2491
        %v2494 = vld [vmem:[#allocation7] sm:$0x1]
        %v2496 = vlaneseq
        %v2497 = vshrl.u32 %v2496, 7
        %v2498 = vsub.s32 0, %v2497
        %v2499 = vrot.slane %v2494, %v2498
        %v2501 = vmul.f32 %v2499, %v1819
        %v2502 = vadd.f32 %v2493, %v2501
        %2503 = vst.msk [vmem:[%s256] sm:$0xff] %vm1124, %v2502
        %s2504 = sand.u32 %s120, 1
        %s2505 = scalar_lea.sflag [#allocation4], %s2504
        %s2506 = sand.u32 %s120, 1
        %s2507 = smul.addr %s2506, 8
        %s2508 = scalar_lea.vmem [#allocation10], %s2507
        // Predicated region
        $region53: #{tpu_custom_call.1} parent=35 // pred_check
          %p2509 = pneg %p130
        $region54: #{tpu_custom_call.1} parent=35 // pred_check_branch
          %2511 = sbr.rel (%p2509) target = $region56
        $region55: #{tpu_custom_call.1} parent=35 // pred_region
          %s2513 = ssub.s32 128, 128
          %2514 = vsyncadd %s2505, %s2513
          %s2515 = smul.addr %s23, 128
          %s2516 = scalar_lea.hbm %s4, %s2515
          %s2518 = sshll.u32 %s2508, 4
          %s2519 = int_to_ptr.vmem [resolvable:$true] %s2518
          %2521 = dma.vmem_to_hbm [thread:$0]  %s2519, 128, %s2516, %s2505
        $region56: #{tpu_custom_call.1} parent=35 // pred_fallthru
          _
      $region36: #{tpu_custom_call.1} parent=5 // pred_fallthru
        _
      %p2522 = scmp.le.s32.totalorder 2, %s18
      // Predicated region
      $region57: #{tpu_custom_call.1} parent=5 // pred_check
        %p2523 = pneg %p2522
      $region58: #{tpu_custom_call.1} parent=5 // pred_check_branch
        %2525 = sbr.rel (%p2523) target = $region60
      $region59: #{tpu_custom_call.1} parent=5 // pred_region
        %s2526 = ssub.s32 %s18, 2
        // Predicated region
        $region61: #{tpu_custom_call.1} parent=59 // pred_check
          %p2527 = pneg %p136
        $region62: #{tpu_custom_call.1} parent=59 // pred_check_branch
          %2529 = sbr.rel (%p2527) target = $region64
        $region63: #{tpu_custom_call.1} parent=59 // pred_region
          %s2530 = sand.u32 %s121, 1
          %s2531 = scalar_lea.sflag [#allocation4], %s2530
          %s2532 = sand.u32 %s121, 1
          %s2533 = smul.addr %s2532, 8
          %s2534 = scalar_lea.vmem [#allocation10], %s2533
          %2535 = dma.done %s2531, 128
        $region64: #{tpu_custom_call.1} parent=59 // pred_fallthru
          _
      $region60: #{tpu_custom_call.1} parent=5 // pred_fallthru
        _
    $region6: #{tpu_custom_call.1} parent=1 // loop_footer
      %s22 = sadd.s32 1, %s18
    $region7: #{tpu_custom_call.1} parent=1 // loop_footer_branch
      %17 = sbr.rel target = $region3
    $region8: #{tpu_custom_call.1} parent=1 // loop_exit
      _
    %2536 = vsyncpa [#allocation3], 1
    %s2537 = scalar_lea.sflag [#allocation3], 1
    %2538 = vsyncpa %s2537, 1
    %2539 = vsyncpa [#allocation6], 1
    %2540 = vsyncpa [#allocation9], 1
    %2541 = vsyncpa [#allocation4], 1
    %s2542 = scalar_lea.sflag [#allocation4], 1
    %2543 = vsyncpa %s2542, 1

</llo_original>
